<compile_context>
chip_gen: v7x
topology: tpu7x:2x2x1
jax: 0.10.0
libtpu: 0.0.40
codegen_flags: <defaults>
</compile_context>

<pallas_src>
import functools
import math

import jax
import jax.numpy as jnp
import numpy as np
from jax import lax
from jax.experimental import pallas as pl
from jax.experimental.pallas import tpu as pltpu


def _rel_sinusoidal_pos_embed(seq_len, embedding_dim):
    """Rows j = 0..2L-1 correspond to relative offsets (j - L); exactly what
    RelativeSinusoidalPositionalEmbedding.forward(mask) returns for seq_len <= 600."""
    half = embedding_dim // 2
    scale = math.log(10000.0) / (half - 1)
    inv = jnp.exp(jnp.arange(half, dtype=jnp.float32) * (-scale))
    pos = jnp.arange(-seq_len, seq_len, dtype=jnp.float32)
    ang = pos[:, None] * inv[None, :]
    return jnp.concatenate([jnp.sin(ang), jnp.cos(ang)], axis=1)  # [2L, hd]


def _rel_mha_kernel(x_ref, xh_ref, wq_ref, wv_ref, rr_ref, rw_ref, pe_ref, mask_ref,
                    o_ref, bd_ref, *, n_shift_bits):
    """One (batch, head) grid step: projections, AC/BD matmuls, skew, softmax, @v."""
    L, W = bd_ref.shape                    # W == 2 * L
    bf16 = jnp.bfloat16

    x = x_ref[0]                           # [L, D]   (full model dim, for projections)
    kh = xh_ref[0, 0]                      # [L, hd]  (k = per-head slice of x, no proj)
    pe = pe_ref[...]                       # [2L, hd]
    rr = rr_ref[0]                         # [1, hd]  (r_r_bias, pre-scaled by 1/scale)
    rw = rw_ref[0]                         # [1, hd]  (r_w_bias, pre-scaled by 1/scale)
    key_pad = mask_ref[0] == 0             # [1, L] bool, True at padded key positions

    # Per-head q / v projections (weights pre-sliced per head by BlockSpec).
    xb = x.astype(bf16)
    q = jnp.dot(xb, wq_ref[0].astype(bf16), preferred_element_type=jnp.float32)  # [L, hd]
    v = jnp.dot(xb, wv_ref[0].astype(bf16), preferred_element_type=jnp.float32)  # [L, hd]

    dn = (((1,), (1,)), ((), ()))          # contract last dims, no batch dims
    # AC[q, k] = (q + r_r_bias) . k        (1/scale already folded into q and rr)
    AC = lax.dot_general((q + rr).astype(bf16), kh.astype(bf16), dn,
                         preferred_element_type=jnp.float32)                     # [L, L]
    # B_ + D_ == (q + r_w_bias) . pe  -> single matmul, D_ hoisted away entirely.
    BD = lax.dot_general((q + rw).astype(bf16), pe.astype(bf16), dn,
                         preferred_element_type=jnp.float32)                     # [L, 2L]

    # ---- relative "_shift":  BD_shift[q, k] = BD[q, L + k - q] ----------------
    # Row q needs a left shift by amt_q = L - q.  Decompose amt_q bitwise and do
    # log2(L) conditional left-shifts in a VMEM scratch; only the [:, :L] prefix
    # is read afterwards, so the stale tail never matters.
    bd_ref[...] = BD
    qidx = lax.broadcasted_iota(jnp.int32, (L, 1), 0)
    amt = L - qidx                                                               # in [1, L]
    for b in range(n_shift_bits):
        s = 1 << b
        do = (amt & s) != 0                                                      # [L, 1]
        shifted = bd_ref[:, s:]                                                  # [L, W - s]
        kept = bd_ref[:, :W - s]
        bd_ref[:, :W - s] = jnp.where(do, shifted, kept)
    bd_shift = bd_ref[:, :L]                                                     # [L, L]

    # ---- masked softmax over keys ---------------------------------------------
    logits = AC + bd_shift
    # Large finite negative instead of -inf: fully padded rows give a uniform
    # distribution instead of NaN; non-degenerate rows are bit-identical.
    logits = jnp.where(key_pad, jnp.float32(-1e30), logits)
    m = jnp.max(logits, axis=-1, keepdims=True)
    p = jnp.exp(logits - m)
    denom = jnp.sum(p, axis=-1, keepdims=True)
    p = p * pl.reciprocal(denom, approx=True)          # EUP reciprocal, no VPU divide
    # TODO(synk): attention dropout (self.dropout_layer) is identity in eval mode.

    oh = jnp.dot(p.astype(bf16), v.astype(bf16), preferred_element_type=jnp.float32)
    o_ref[0, 0] = oh.astype(o_ref.dtype)               # [L, hd] block, dense writeback DMA


def relative_multi_head_attn(x, mask, wqv_t, r_r_bias, r_w_bias, pos_embed,
                             *, n_head, scale=False):
    B, L, D = x.shape
    H = n_head
    hd = D // H
    inv_s = (1.0 / math.sqrt(hd)) if scale else 1.0

    # Fold 1/scale into the q-producing weight and both relative biases (so the
    # kernel never divides the [L, L] logits).  Re-arrange weights / k so the
    # head axis is a leading (grid-sliceable) dimension -> all in-kernel indexing
    # is static and per-head live ranges are bounded by the grid boundary.
    wq_t = (wqv_t[:, :D] * inv_s).reshape(D, H, hd).transpose(1, 0, 2)   # [H, D, hd]
    wv_t = wqv_t[:, D:].reshape(D, H, hd).transpose(1, 0, 2)             # [H, D, hd]
    rrb = (r_r_bias * inv_s).reshape(H, 1, hd)
    rwb = (r_w_bias * inv_s).reshape(H, 1, hd)
    x_heads = x.reshape(B, L, H, hd).transpose(0, 2, 1, 3)               # [B, H, L, hd]
    mask3 = mask.reshape(B, 1, L).astype(jnp.int32)

    kernel = functools.partial(_rel_mha_kernel, n_shift_bits=int(L).bit_length())

    out_heads = pl.pallas_call(
        kernel,
        out_shape=jax.ShapeDtypeStruct((B, H, L, hd), x.dtype),
        grid_spec=pltpu.PrefetchScalarGridSpec(
            num_scalar_prefetch=0,
            grid=(B, H),                                            # both axes independent
            in_specs=[
                pl.BlockSpec((1, L, D), lambda b, h: (b, 0, 0)),        # x (full D, per batch)
                pl.BlockSpec((1, 1, L, hd), lambda b, h: (b, h, 0, 0)), # k = x per head
                pl.BlockSpec((1, D, hd), lambda b, h: (h, 0, 0)),       # Wq^T per head (pre-scaled)
                pl.BlockSpec((1, D, hd), lambda b, h: (h, 0, 0)),       # Wv^T per head
                pl.BlockSpec((1, 1, hd), lambda b, h: (h, 0, 0)),       # r_r_bias per head
                pl.BlockSpec((1, 1, hd), lambda b, h: (h, 0, 0)),       # r_w_bias per head
                pl.BlockSpec((2 * L, hd), lambda b, h: (0, 0)),         # rel. pos embed
                pl.BlockSpec((1, 1, L), lambda b, h: (b, 0, 0)),        # key mask per batch
            ],
            out_specs=pl.BlockSpec((1, 1, L, hd), lambda b, h: (b, h, 0, 0)),
            scratch_shapes=[pltpu.VMEM((L, 2 * L), jnp.float32)],       # BD skew scratch
        ),
        compiler_params=pltpu.CompilerParams(
            dimension_semantics=("parallel", "parallel")),
    )(x, x_heads, wq_t, wv_t, rrb, rwb, pos_embed, mask3)

    # Head-interleave back to [B, L, D] (cheap XLA transpose outside the kernel).
    return out_heads.transpose(0, 2, 1, 3).reshape(B, L, D)


def _reference(x, mask, wqv_t, rrb, rwb, pe, scale):
    """Pure-JAX transcription of the PyTorch forward (incl. the pad/reshape _shift)."""
    B, L, D = x.shape
    H, hd = rrb.shape
    with jax.default_matmul_precision("highest"):
        qv = x @ wqv_t
        q, v = qv[..., :D], qv[..., D:]
        q = q.reshape(B, L, H, hd).transpose(0, 2, 1, 3)
        k = x.reshape(B, L, H, hd).transpose(0, 2, 1, 3)
        v = v.reshape(B, L, H, hd).transpose(0, 2, 1, 3)
        rw_head_q = q + rrb[None, :, None, :]
        AC = jnp.einsum('bnqd,bnkd->bnqk', rw_head_q, k)
        D_ = jnp.einsum('nd,ld->nl', rwb, pe)[None, :, None, :]
        B_ = jnp.einsum('bnqd,ld->bnql', q, pe)
        BD = B_ + D_
        BD = jnp.concatenate([BD, jnp.zeros((B, H, L, 1), BD.dtype)], axis=-1)
        BD = BD.reshape(B, H, 2 * L + 1, L)[:, :, :-1].reshape(B, H, L, 2 * L)[:, :, :, L:]
        attn = (AC + BD) / scale
        attn = jnp.where((mask == 0)[:, None, None, :], -jnp.inf, attn)
        attn = jax.nn.softmax(attn, axis=-1)
        out = jnp.einsum('bnqk,bnkd->bnqd', attn, v)
    return out.transpose(0, 2, 1, 3).reshape(B, L, D)


if __name__ == "__main__":
    B, L = 2, 64
    d_model, n_head = 32, 4
    head_dim = d_model // n_head
    use_scale = True

    key = jax.random.PRNGKey(0)
    kx, kw, kr1, kr2 = jax.random.split(key, 4)

    x = jax.random.normal(kx, (B, L, d_model), dtype=jnp.float32)
    mask_np = np.ones((B, L), dtype=np.int32)
    mask_np[1, L - 16:] = 0                                  # pad the tail of batch 1
    mask = jnp.asarray(mask_np)

    # Deterministic parameter init (xavier-normal style), matching module shapes.
    wqv = jax.random.normal(kw, (2 * d_model, d_model), dtype=jnp.float32) * math.sqrt(
        2.0 / (d_model + 2 * d_model))                       # Linear weight [2D, D]
    wqv_t = wqv.T                                            # pass transposed [D, 2D]
    xav = math.sqrt(2.0 / (n_head + head_dim))
    r_r_bias = jax.random.normal(kr1, (n_head, head_dim), dtype=jnp.float32) * xav
    r_w_bias = jax.random.normal(kr2, (n_head, head_dim), dtype=jnp.float32) * xav

    # TODO(synk): RelativeEmbedding's dynamic buffer re-allocation for seq_len > 600
    # is a host-side cache trick; for seq_len <= 600 this table is exact.
    pos_embed = _rel_sinusoidal_pos_embed(L, head_dim)       # [2L, head_dim]

    out = relative_multi_head_attn(x, mask, wqv_t, r_r_bias, r_w_bias, pos_embed,
                                   n_head=n_head, scale=use_scale)
    out = jax.block_until_ready(out)

    ref = _reference(x, mask, wqv_t, r_r_bias, r_w_bias, pos_embed,
                     math.sqrt(head_dim) if use_scale else 1.0)
    # Tolerance accounts for bf16 MXU operands (f32 accumulation) vs the
    # highest-precision f32 reference.
    np.testing.assert_allclose(np.asarray(out), np.asarray(ref), rtol=2e-2, atol=2e-2)

    print("KERNEL_OK")
</pallas_src>

<mosaic_0001>
module attributes {stable_mosaic.version = 11 : i64} {
  func.func @_rel_mha_kernel(%arg0: i32, %arg1: i32, %arg2: memref<1x64x32xf32, #tpu.memory_space<vmem>>, %arg3: memref<1x1x64x8xf32, #tpu.memory_space<vmem>>, %arg4: memref<1x32x8xf32, #tpu.memory_space<vmem>>, %arg5: memref<1x32x8xf32, #tpu.memory_space<vmem>>, %arg6: memref<1x1x8xf32, #tpu.memory_space<vmem>>, %arg7: memref<1x1x8xf32, #tpu.memory_space<vmem>>, %arg8: memref<128x8xf32, #tpu.memory_space<vmem>>, %arg9: memref<1x1x64xi32, #tpu.memory_space<vmem>>, %arg10: memref<1x1x64x8xf32, #tpu.memory_space<vmem>>, %arg11: memref<64x128xf32, #tpu.memory_space<vmem>>) attributes {dimension_semantics = [#tpu.dimension_semantics<parallel>, #tpu.dimension_semantics<parallel>], iteration_bounds = array<i64: 2, 4>, scalar_prefetch = 0 : i64, scratch_operands = 1 : i64, tpu.core_type = #tpu.core_type<tc>, window_params = [{transform_indices = @transform_0, window_bounds = array<i64: 1, 64, 32>}, {transform_indices = @transform_1, window_bounds = array<i64: 1, 1, 64, 8>}, {transform_indices = @transform_2, window_bounds = array<i64: 1, 32, 8>}, {transform_indices = @transform_3, window_bounds = array<i64: 1, 32, 8>}, {transform_indices = @transform_4, window_bounds = array<i64: 1, 1, 8>}, {transform_indices = @transform_5, window_bounds = array<i64: 1, 1, 8>}, {pipeline_mode = #tpu.pipeline_mode<synchronous>, transform_indices = @transform_6, window_bounds = array<i64: 128, 8>}, {transform_indices = @transform_7, window_bounds = array<i64: 1, 1, 64>}, {transform_indices = @transform_8, window_bounds = array<i64: 1, 1, 64, 8>}]} {
    %c0 = arith.constant 0 : index
    %c0_0 = arith.constant 0 : index
    %c0_1 = arith.constant 0 : index
    %0 = vector.load %arg2[%c0, %c0_0, %c0_1] : memref<1x64x32xf32, #tpu.memory_space<vmem>>, vector<1x64x32xf32>
    %1 = vector.shape_cast %0 : vector<1x64x32xf32> to vector<64x32xf32>
    %c0_2 = arith.constant 0 : index
    %c0_3 = arith.constant 0 : index
    %c0_4 = arith.constant 0 : index
    %c0_5 = arith.constant 0 : index
    %2 = vector.load %arg3[%c0_2, %c0_3, %c0_4, %c0_5] : memref<1x1x64x8xf32, #tpu.memory_space<vmem>>, vector<1x1x64x8xf32>
    %3 = vector.shape_cast %2 : vector<1x1x64x8xf32> to vector<64x8xf32>
    %c0_6 = arith.constant 0 : index
    %c0_7 = arith.constant 0 : index
    %4 = vector.load %arg8[%c0_6, %c0_7] : memref<128x8xf32, #tpu.memory_space<vmem>>, vector<128x8xf32>
    %c0_8 = arith.constant 0 : index
    %c0_9 = arith.constant 0 : index
    %c0_10 = arith.constant 0 : index
    %5 = vector.load %arg6[%c0_8, %c0_9, %c0_10] : memref<1x1x8xf32, #tpu.memory_space<vmem>>, vector<1x1x8xf32>
    %6 = vector.shape_cast %5 : vector<1x1x8xf32> to vector<1x8xf32>
    %c0_11 = arith.constant 0 : index
    %c0_12 = arith.constant 0 : index
    %c0_13 = arith.constant 0 : index
    %7 = vector.load %arg7[%c0_11, %c0_12, %c0_13] : memref<1x1x8xf32, #tpu.memory_space<vmem>>, vector<1x1x8xf32>
    %8 = vector.shape_cast %7 : vector<1x1x8xf32> to vector<1x8xf32>
    %c0_14 = arith.constant 0 : index
    %c0_15 = arith.constant 0 : index
    %c0_16 = arith.constant 0 : index
    %9 = vector.load %arg9[%c0_14, %c0_15, %c0_16] : memref<1x1x64xi32, #tpu.memory_space<vmem>>, vector<1x1x64xi32>
    %10 = vector.shape_cast %9 : vector<1x1x64xi32> to vector<1x64xi32>
    %c0_i32 = arith.constant 0 : i32
    %11 = vector.broadcast %c0_i32 : i32 to vector<1x64xi32>
    %12 = arith.cmpi eq, %10, %11 : vector<1x64xi32>
    %13 = arith.truncf %1 : vector<64x32xf32> to vector<64x32xbf16>
    %c0_17 = arith.constant 0 : index
    %c0_18 = arith.constant 0 : index
    %c0_19 = arith.constant 0 : index
    %14 = vector.load %arg4[%c0_17, %c0_18, %c0_19] : memref<1x32x8xf32, #tpu.memory_space<vmem>>, vector<1x32x8xf32>
    %15 = vector.shape_cast %14 : vector<1x32x8xf32> to vector<32x8xf32>
    %16 = arith.truncf %15 : vector<32x8xf32> to vector<32x8xbf16>
    %cst = arith.constant dense<0.000000e+00> : vector<64x8xf32>
    %17 = tpu.matmul %13, %16, %cst {dimension_numbers = #tpu.dot_dimension_numbers<[1], [0], [0], [1], [0, 0, 1, 1], [], []>} : vector<64x32xbf16>, vector<32x8xbf16>, vector<64x8xf32> -> vector<64x8xf32>
    %c0_20 = arith.constant 0 : index
    %c0_21 = arith.constant 0 : index
    %c0_22 = arith.constant 0 : index
    %18 = vector.load %arg5[%c0_20, %c0_21, %c0_22] : memref<1x32x8xf32, #tpu.memory_space<vmem>>, vector<1x32x8xf32>
    %19 = vector.shape_cast %18 : vector<1x32x8xf32> to vector<32x8xf32>
    %20 = arith.truncf %19 : vector<32x8xf32> to vector<32x8xbf16>
    %cst_23 = arith.constant dense<0.000000e+00> : vector<64x8xf32>
    %21 = tpu.matmul %13, %20, %cst_23 {dimension_numbers = #tpu.dot_dimension_numbers<[1], [0], [0], [1], [0, 0, 1, 1], [], []>} : vector<64x32xbf16>, vector<32x8xbf16>, vector<64x8xf32> -> vector<64x8xf32>
    %22 = vector.broadcast %6 : vector<1x8xf32> to vector<64x8xf32>
    %23 = arith.addf %17, %22 : vector<64x8xf32>
    %24 = arith.truncf %23 : vector<64x8xf32> to vector<64x8xbf16>
    %25 = arith.truncf %3 : vector<64x8xf32> to vector<64x8xbf16>
    %cst_24 = arith.constant dense<0.000000e+00> : vector<64x64xf32>
    %26 = tpu.matmul %24, %25, %cst_24 {dimension_numbers = #tpu.dot_dimension_numbers<[1], [1], [0], [0], [0, 0, 1, 0], [], []>} : vector<64x8xbf16>, vector<64x8xbf16>, vector<64x64xf32> -> vector<64x64xf32>
    %27 = vector.broadcast %8 : vector<1x8xf32> to vector<64x8xf32>
    %28 = arith.addf %17, %27 : vector<64x8xf32>
    %29 = arith.truncf %28 : vector<64x8xf32> to vector<64x8xbf16>
    %30 = arith.truncf %4 : vector<128x8xf32> to vector<128x8xbf16>
    %cst_25 = arith.constant dense<0.000000e+00> : vector<64x128xf32>
    %31 = tpu.matmul %29, %30, %cst_25 {dimension_numbers = #tpu.dot_dimension_numbers<[1], [1], [0], [0], [0, 0, 1, 0], [], []>} : vector<64x8xbf16>, vector<128x8xbf16>, vector<64x128xf32> -> vector<64x128xf32>
    %c0_26 = arith.constant 0 : index
    %c0_27 = arith.constant 0 : index
    %32 = vector.load %arg11[%c0_26, %c0_27] : memref<64x128xf32, #tpu.memory_space<vmem>>, vector<64x128xf32>
    tpu.vector_store %arg11[%c0_26, %c0_27], %31 {strides = array<i32>} : memref<64x128xf32, #tpu.memory_space<vmem>>, vector<64x128xf32>,
    %33 = tpu.iota {dimensions = array<i32: 0>} : vector<64x1xi32>
    %c64_i32 = arith.constant 64 : i32
    %34 = vector.broadcast %c64_i32 : i32 to vector<64x1xi32>
    %35 = arith.subi %34, %33 : vector<64x1xi32>
    %c1_i32 = arith.constant 1 : i32
    %36 = vector.broadcast %c1_i32 : i32 to vector<64x1xi32>
    %37 = arith.andi %35, %36 : vector<64x1xi32>
    %c0_i32_28 = arith.constant 0 : i32
    %38 = vector.broadcast %c0_i32_28 : i32 to vector<64x1xi32>
    %39 = arith.cmpi ne, %37, %38 : vector<64x1xi32>
    %c0_29 = arith.constant 0 : index
    %c1 = arith.constant 1 : index
    %40 = vector.load %arg11[%c0_29, %c1] : memref<64x128xf32, #tpu.memory_space<vmem>>, vector<64x127xf32>
    %c0_30 = arith.constant 0 : index
    %c0_31 = arith.constant 0 : index
    %41 = vector.load %arg11[%c0_30, %c0_31] : memref<64x128xf32, #tpu.memory_space<vmem>>, vector<64x127xf32>
    %42 = vector.shape_cast %39 : vector<64x1xi1> to vector<64x1xi1>
    %43 = vector.broadcast %42 : vector<64x1xi1> to vector<64x127xi1>
    %44 = arith.select %43, %40, %41 : vector<64x127xi1>, vector<64x127xf32>
    %c0_32 = arith.constant 0 : index
    %c0_33 = arith.constant 0 : index
    %45 = vector.load %arg11[%c0_32, %c0_33] : memref<64x128xf32, #tpu.memory_space<vmem>>, vector<64x127xf32>
    tpu.vector_store %arg11[%c0_32, %c0_33], %44 {strides = array<i32>} : memref<64x128xf32, #tpu.memory_space<vmem>>, vector<64x127xf32>,
    %c2_i32 = arith.constant 2 : i32
    %46 = vector.broadcast %c2_i32 : i32 to vector<64x1xi32>
    %47 = arith.andi %35, %46 : vector<64x1xi32>
    %c0_i32_34 = arith.constant 0 : i32
    %48 = vector.broadcast %c0_i32_34 : i32 to vector<64x1xi32>
    %49 = arith.cmpi ne, %47, %48 : vector<64x1xi32>
    %c0_35 = arith.constant 0 : index
    %c2 = arith.constant 2 : index
    %50 = vector.load %arg11[%c0_35, %c2] : memref<64x128xf32, #tpu.memory_space<vmem>>, vector<64x126xf32>
    %c0_36 = arith.constant 0 : index
    %c0_37 = arith.constant 0 : index
    %51 = vector.load %arg11[%c0_36, %c0_37] : memref<64x128xf32, #tpu.memory_space<vmem>>, vector<64x126xf32>
    %52 = vector.shape_cast %49 : vector<64x1xi1> to vector<64x1xi1>
    %53 = vector.broadcast %52 : vector<64x1xi1> to vector<64x126xi1>
    %54 = arith.select %53, %50, %51 : vector<64x126xi1>, vector<64x126xf32>
    %c0_38 = arith.constant 0 : index
    %c0_39 = arith.constant 0 : index
    %55 = vector.load %arg11[%c0_38, %c0_39] : memref<64x128xf32, #tpu.memory_space<vmem>>, vector<64x126xf32>
    tpu.vector_store %arg11[%c0_38, %c0_39], %54 {strides = array<i32>} : memref<64x128xf32, #tpu.memory_space<vmem>>, vector<64x126xf32>,
    %c4_i32 = arith.constant 4 : i32
    %56 = vector.broadcast %c4_i32 : i32 to vector<64x1xi32>
    %57 = arith.andi %35, %56 : vector<64x1xi32>
    %c0_i32_40 = arith.constant 0 : i32
    %58 = vector.broadcast %c0_i32_40 : i32 to vector<64x1xi32>
    %59 = arith.cmpi ne, %57, %58 : vector<64x1xi32>
    %c0_41 = arith.constant 0 : index
    %c4 = arith.constant 4 : index
    %60 = vector.load %arg11[%c0_41, %c4] : memref<64x128xf32, #tpu.memory_space<vmem>>, vector<64x124xf32>
    %c0_42 = arith.constant 0 : index
    %c0_43 = arith.constant 0 : index
    %61 = vector.load %arg11[%c0_42, %c0_43] : memref<64x128xf32, #tpu.memory_space<vmem>>, vector<64x124xf32>
    %62 = vector.shape_cast %59 : vector<64x1xi1> to vector<64x1xi1>
    %63 = vector.broadcast %62 : vector<64x1xi1> to vector<64x124xi1>
    %64 = arith.select %63, %60, %61 : vector<64x124xi1>, vector<64x124xf32>
    %c0_44 = arith.constant 0 : index
    %c0_45 = arith.constant 0 : index
    %65 = vector.load %arg11[%c0_44, %c0_45] : memref<64x128xf32, #tpu.memory_space<vmem>>, vector<64x124xf32>
    tpu.vector_store %arg11[%c0_44, %c0_45], %64 {strides = array<i32>} : memref<64x128xf32, #tpu.memory_space<vmem>>, vector<64x124xf32>,
    %c8_i32 = arith.constant 8 : i32
    %66 = vector.broadcast %c8_i32 : i32 to vector<64x1xi32>
    %67 = arith.andi %35, %66 : vector<64x1xi32>
    %c0_i32_46 = arith.constant 0 : i32
    %68 = vector.broadcast %c0_i32_46 : i32 to vector<64x1xi32>
    %69 = arith.cmpi ne, %67, %68 : vector<64x1xi32>
    %c0_47 = arith.constant 0 : index
    %c8 = arith.constant 8 : index
    %70 = vector.load %arg11[%c0_47, %c8] : memref<64x128xf32, #tpu.memory_space<vmem>>, vector<64x120xf32>
    %c0_48 = arith.constant 0 : index
    %c0_49 = arith.constant 0 : index
    %71 = vector.load %arg11[%c0_48, %c0_49] : memref<64x128xf32, #tpu.memory_space<vmem>>, vector<64x120xf32>
    %72 = vector.shape_cast %69 : vector<64x1xi1> to vector<64x1xi1>
    %73 = vector.broadcast %72 : vector<64x1xi1> to vector<64x120xi1>
    %74 = arith.select %73, %70, %71 : vector<64x120xi1>, vector<64x120xf32>
    %c0_50 = arith.constant 0 : index
    %c0_51 = arith.constant 0 : index
    %75 = vector.load %arg11[%c0_50, %c0_51] : memref<64x128xf32, #tpu.memory_space<vmem>>, vector<64x120xf32>
    tpu.vector_store %arg11[%c0_50, %c0_51], %74 {strides = array<i32>} : memref<64x128xf32, #tpu.memory_space<vmem>>, vector<64x120xf32>,
    %c16_i32 = arith.constant 16 : i32
    %76 = vector.broadcast %c16_i32 : i32 to vector<64x1xi32>
    %77 = arith.andi %35, %76 : vector<64x1xi32>
    %c0_i32_52 = arith.constant 0 : i32
    %78 = vector.broadcast %c0_i32_52 : i32 to vector<64x1xi32>
    %79 = arith.cmpi ne, %77, %78 : vector<64x1xi32>
    %c0_53 = arith.constant 0 : index
    %c16 = arith.constant 16 : index
    %80 = vector.load %arg11[%c0_53, %c16] : memref<64x128xf32, #tpu.memory_space<vmem>>, vector<64x112xf32>
    %c0_54 = arith.constant 0 : index
    %c0_55 = arith.constant 0 : index
    %81 = vector.load %arg11[%c0_54, %c0_55] : memref<64x128xf32, #tpu.memory_space<vmem>>, vector<64x112xf32>
    %82 = vector.shape_cast %79 : vector<64x1xi1> to vector<64x1xi1>
    %83 = vector.broadcast %82 : vector<64x1xi1> to vector<64x112xi1>
    %84 = arith.select %83, %80, %81 : vector<64x112xi1>, vector<64x112xf32>
    %c0_56 = arith.constant 0 : index
    %c0_57 = arith.constant 0 : index
    %85 = vector.load %arg11[%c0_56, %c0_57] : memref<64x128xf32, #tpu.memory_space<vmem>>, vector<64x112xf32>
    tpu.vector_store %arg11[%c0_56, %c0_57], %84 {strides = array<i32>} : memref<64x128xf32, #tpu.memory_space<vmem>>, vector<64x112xf32>,
    %c32_i32 = arith.constant 32 : i32
    %86 = vector.broadcast %c32_i32 : i32 to vector<64x1xi32>
    %87 = arith.andi %35, %86 : vector<64x1xi32>
    %c0_i32_58 = arith.constant 0 : i32
    %88 = vector.broadcast %c0_i32_58 : i32 to vector<64x1xi32>
    %89 = arith.cmpi ne, %87, %88 : vector<64x1xi32>
    %c0_59 = arith.constant 0 : index
    %c32 = arith.constant 32 : index
    %90 = vector.load %arg11[%c0_59, %c32] : memref<64x128xf32, #tpu.memory_space<vmem>>, vector<64x96xf32>
    %c0_60 = arith.constant 0 : index
    %c0_61 = arith.constant 0 : index
    %91 = vector.load %arg11[%c0_60, %c0_61] : memref<64x128xf32, #tpu.memory_space<vmem>>, vector<64x96xf32>
    %92 = vector.shape_cast %89 : vector<64x1xi1> to vector<64x1xi1>
    %93 = vector.broadcast %92 : vector<64x1xi1> to vector<64x96xi1>
    %94 = arith.select %93, %90, %91 : vector<64x96xi1>, vector<64x96xf32>
    %c0_62 = arith.constant 0 : index
    %c0_63 = arith.constant 0 : index
    %95 = vector.load %arg11[%c0_62, %c0_63] : memref<64x128xf32, #tpu.memory_space<vmem>>, vector<64x96xf32>
    tpu.vector_store %arg11[%c0_62, %c0_63], %94 {strides = array<i32>} : memref<64x128xf32, #tpu.memory_space<vmem>>, vector<64x96xf32>,
    %c64_i32_64 = arith.constant 64 : i32
    %96 = vector.broadcast %c64_i32_64 : i32 to vector<64x1xi32>
    %97 = arith.andi %35, %96 : vector<64x1xi32>
    %c0_i32_65 = arith.constant 0 : i32
    %98 = vector.broadcast %c0_i32_65 : i32 to vector<64x1xi32>
    %99 = arith.cmpi ne, %97, %98 : vector<64x1xi32>
    %c0_66 = arith.constant 0 : index
    %c64 = arith.constant 64 : index
    %100 = vector.load %arg11[%c0_66, %c64] : memref<64x128xf32, #tpu.memory_space<vmem>>, vector<64x64xf32>
    %c0_67 = arith.constant 0 : index
    %c0_68 = arith.constant 0 : index
    %101 = vector.load %arg11[%c0_67, %c0_68] : memref<64x128xf32, #tpu.memory_space<vmem>>, vector<64x64xf32>
    %102 = vector.shape_cast %99 : vector<64x1xi1> to vector<64x1xi1>
    %103 = vector.broadcast %102 : vector<64x1xi1> to vector<64x64xi1>
    %104 = arith.select %103, %100, %101 : vector<64x64xi1>, vector<64x64xf32>
    %c0_69 = arith.constant 0 : index
    %c0_70 = arith.constant 0 : index
    %105 = vector.load %arg11[%c0_69, %c0_70] : memref<64x128xf32, #tpu.memory_space<vmem>>, vector<64x64xf32>
    tpu.vector_store %arg11[%c0_69, %c0_70], %104 {strides = array<i32>} : memref<64x128xf32, #tpu.memory_space<vmem>>, vector<64x64xf32>,
    %c0_71 = arith.constant 0 : index
    %c0_72 = arith.constant 0 : index
    %106 = vector.load %arg11[%c0_71, %c0_72] : memref<64x128xf32, #tpu.memory_space<vmem>>, vector<64x64xf32>
    %107 = arith.addf %26, %106 : vector<64x64xf32>
    %cst_73 = arith.constant -1.000000e+30 : f32
    %108 = vector.shape_cast %12 : vector<1x64xi1> to vector<1x64xi1>
    %109 = vector.broadcast %108 : vector<1x64xi1> to vector<64x64xi1>
    %110 = vector.broadcast %cst_73 : f32 to vector<64x64xf32>
    %111 = arith.select %109, %110, %107 : vector<64x64xi1>, vector<64x64xf32>
    %cst_74 = arith.constant dense<0xFF800000> : vector<64xf32>
    %112 = vector.multi_reduction <maximumf>, %111, %cst_74 [1] : vector<64x64xf32> to vector<64xf32>
    %113 = vector.shape_cast %112 : vector<64xf32> to vector<64x1xf32>
    %114 = vector.broadcast %113 : vector<64x1xf32> to vector<64x64xf32>
    %115 = arith.subf %111, %114 : vector<64x64xf32>
    %116 = math.exp %115 : vector<64x64xf32>
    %cst_75 = arith.constant dense<0.000000e+00> : vector<64xf32>
    %117 = vector.multi_reduction <add>, %116, %cst_75 [1] : vector<64x64xf32> to vector<64xf32>
    %118 = vector.shape_cast %117 : vector<64xf32> to vector<64x1xf32>
    %119 = tpu.reciprocal %118 {approx = true} : vector<64x1xf32> -> vector<64x1xf32>
    %120 = vector.broadcast %119 : vector<64x1xf32> to vector<64x64xf32>
    %121 = arith.mulf %116, %120 : vector<64x64xf32>
    %122 = arith.truncf %121 : vector<64x64xf32> to vector<64x64xbf16>
    %123 = arith.truncf %21 : vector<64x8xf32> to vector<64x8xbf16>
    %cst_76 = arith.constant dense<0.000000e+00> : vector<64x8xf32>
    %124 = tpu.matmul %122, %123, %cst_76 {dimension_numbers = #tpu.dot_dimension_numbers<[1], [0], [0], [1], [0, 0, 1, 1], [], []>} : vector<64x64xbf16>, vector<64x8xbf16>, vector<64x8xf32> -> vector<64x8xf32>
    %c0_77 = arith.constant 0 : index
    %c0_78 = arith.constant 0 : index
    %c0_79 = arith.constant 0 : index
    %c0_80 = arith.constant 0 : index
    %125 = vector.load %arg10[%c0_77, %c0_78, %c0_79, %c0_80] : memref<1x1x64x8xf32, #tpu.memory_space<vmem>>, vector<1x1x64x8xf32>
    %126 = vector.shape_cast %125 : vector<1x1x64x8xf32> to vector<64x8xf32>
    %127 = vector.shape_cast %124 : vector<64x8xf32> to vector<1x1x64x8xf32>
    tpu.vector_store %arg10[%c0_77, %c0_78, %c0_79, %c0_80], %127 {strides = array<i32>} : memref<1x1x64x8xf32, #tpu.memory_space<vmem>>, vector<1x1x64x8xf32>,
    return
  }
  func.func @transform_0(%arg0: i32, %arg1: i32) -> (i32, i32, i32) {
    %c0_i32 = arith.constant 0 : i32
    %c0_i32_0 = arith.constant 0 : i32
    %c0_i32_1 = arith.constant 0 : i32
    return %arg0, %c0_i32, %c0_i32_0 : i32, i32, i32
  }
  func.func @transform_1(%arg0: i32, %arg1: i32) -> (i32, i32, i32, i32) {
    %c0_i32 = arith.constant 0 : i32
    %c0_i32_0 = arith.constant 0 : i32
    %c0_i32_1 = arith.constant 0 : i32
    return %arg0, %arg1, %c0_i32, %c0_i32_0 : i32, i32, i32, i32
  }
  func.func @transform_2(%arg0: i32, %arg1: i32) -> (i32, i32, i32) {
    %c0_i32 = arith.constant 0 : i32
    %c0_i32_0 = arith.constant 0 : i32
    %c0_i32_1 = arith.constant 0 : i32
    return %arg1, %c0_i32, %c0_i32_0 : i32, i32, i32
  }
  func.func @transform_3(%arg0: i32, %arg1: i32) -> (i32, i32, i32) {
    %c0_i32 = arith.constant 0 : i32
    %c0_i32_0 = arith.constant 0 : i32
    %c0_i32_1 = arith.constant 0 : i32
    return %arg1, %c0_i32, %c0_i32_0 : i32, i32, i32
  }
  func.func @transform_4(%arg0: i32, %arg1: i32) -> (i32, i32, i32) {
    %c0_i32 = arith.constant 0 : i32
    %c0_i32_0 = arith.constant 0 : i32
    %c0_i32_1 = arith.constant 0 : i32
    return %arg1, %c0_i32, %c0_i32_0 : i32, i32, i32
  }
  func.func @transform_5(%arg0: i32, %arg1: i32) -> (i32, i32, i32) {
    %c0_i32 = arith.constant 0 : i32
    %c0_i32_0 = arith.constant 0 : i32
    %c0_i32_1 = arith.constant 0 : i32
    return %arg1, %c0_i32, %c0_i32_0 : i32, i32, i32
  }
  func.func @transform_6(%arg0: i32, %arg1: i32) -> (i32, i32) {
    %c0_i32 = arith.constant 0 : i32
    %c0_i32_0 = arith.constant 0 : i32
    %c0_i32_1 = arith.constant 0 : i32
    return %c0_i32, %c0_i32_0 : i32, i32
  }
  func.func @transform_7(%arg0: i32, %arg1: i32) -> (i32, i32, i32) {
    %c0_i32 = arith.constant 0 : i32
    %c0_i32_0 = arith.constant 0 : i32
    %c0_i32_1 = arith.constant 0 : i32
    return %arg0, %c0_i32, %c0_i32_0 : i32, i32, i32
  }
  func.func @transform_8(%arg0: i32, %arg1: i32) -> (i32, i32, i32, i32) {
    %c0_i32 = arith.constant 0 : i32
    %c0_i32_0 = arith.constant 0 : i32
    %c0_i32_1 = arith.constant 0 : i32
    return %arg0, %arg1, %c0_i32, %c0_i32_0 : i32, i32, i32, i32
  }
}

</mosaic_0001>

<llo_original>
// kernel: tpu_custom_call.1
$region0: #{tpu_custom_call.1}
  #allocation0 [shape = 'u32[]', space=smem, size = 0x4, offset = 0x4, fixed_abs, tag = 'smem constant byte address 0x4 - core index']
  #allocation1 [shape = 'u32[144,128]{1,0:T(1,128)}', space=vmem, size = 0x12000, scoped, tag = 'internal scratch']
  #allocation2 [shape = 'f32[64,128]{1,0:T(8,128)}', space=vmem, size = 0x8000, scoped, tag = 'scratch operand']
  %s0 = inlined_call_operand.vmem [shape: f32[2,64,32], index: 0, kind: input, shape index: {}]
  %s1 = inlined_call_operand.vmem [shape: f32[2,4,64,8], index: 1, kind: input, shape index: {}]
  %s2 = inlined_call_operand.vmem [shape: f32[4,32,8], index: 2, kind: input, shape index: {}]
  %s3 = inlined_call_operand.vmem [shape: f32[4,32,8], index: 3, kind: input, shape index: {}]
  %s4 = inlined_call_operand.vmem [shape: f32[4,1,8], index: 4, kind: input, shape index: {}]
  %s5 = inlined_call_operand.vmem [shape: f32[4,1,8], index: 5, kind: input, shape index: {}]
  %s6 = inlined_call_operand.vmem [shape: f32[128,8], index: 6, kind: input, shape index: {}]
  %s7 = inlined_call_operand.vmem [shape: s32[2,1,64], index: 7, kind: input, shape index: {}]
  %s8 = inlined_call_operand.vmem [shape: f32[2,4,64,8], index: 8, kind: output, shape index: {}]
  %s9 = sld [smem:[#allocation0]]
  $region65: #{tpu_custom_call.1} parent=0
    _
  %s11 = ssub.s32 1, %s9
  %s12 = scalar_select 0, %s11, %s9
  loop: start=0, step=1, limit=10
  $region2: #{tpu_custom_call.1} parent=0 // loop_pre_header
    _
  $region3: #{tpu_custom_call.1} parent=0 // loop_header
    %s14 = sphi 0, %s18
    %p15 = scmp.ge.s32.totalorder %s14, 10
    %s21 = sphi 0, %s33
    %s22 = sphi 0, %s29
    %s23 = sphi 0, %s21
    %s24 = sphi 0, %s22
    %s25 = sphi 0, %s23
    %s26 = sphi 0, %s24
    %s36 = sphi 0, %s38
    %s39 = sphi 0, %s36
    %s40 = sphi 0, %s39
    %s56 = sphi 0, %s40
    %s64 = sphi 0, %s66
    %s67 = sphi 0, %s64
    %s68 = sphi 0, %s67
    %s84 = sphi 0, %s68
    %s90 = sphi 0, %s92
    %s93 = sphi 0, %s90
    %s94 = sphi 0, %s93
    %s110 = sphi 0, %s94
    %s116 = sphi 0, %s118
    %s119 = sphi 0, %s116
    %s120 = sphi 0, %s119
    %s136 = sphi 0, %s120
    %s142 = sphi 0, %s144
    %s145 = sphi 0, %s142
    %s146 = sphi 0, %s145
    %s162 = sphi 0, %s146
    %s168 = sphi 0, %s170
    %s171 = sphi 0, %s168
    %s172 = sphi 0, %s171
    %s188 = sphi 0, %s172
    %s192 = sphi 0, %s192
    %s194 = sphi 0, %s192
    %s195 = sphi 0, %s194
    %s209 = sphi 0, %s195
    %s215 = sphi 0, %s217
    %s218 = sphi 0, %s215
    %s219 = sphi 0, %s218
    %s235 = sphi 0, %s219
    %s243 = sphi 0, %s245
    %s246 = sphi 0, %s243
    %s247 = sphi 0, %s246
    %s263 = sphi 0, %s247
  $region4: #{tpu_custom_call.1} parent=0 // loop_header_branch
    %17 = sbr.rel (%p15) target = $region8
  $region5: #{tpu_custom_call.1} parent=0 // loop_body
    %s19 = ssub.s32 %s14, 1
    %s20 = ssub.s32 %s14, 2
    %s27 = sadd.s32 1, %s22
    %p28 = scmp.ge.s32.totalorder %s27, 4
    %s29 = scalar_select %p28, 0, %s27
    %s30 = sadd.s32 1, %s21
    %s31 = scalar_select %p28, %s30, %s21
    %p32 = scmp.ge.s32.totalorder %s31, 2
    %s33 = scalar_select %p32, 0, %s31
    %s34 = ssub.s32 %s21, %s33
    %p35 = scmp.eq.s32.totalorder %s34, 0
    %s37 = sadd.s32 %s36, 1
    %s38 = scalar_select %p35, %s36, %s37
    %p41 = pneg %p35
    %p42 = scmp.eq.s32.totalorder %s14, 7
    %p43 = por %p41, %p42
    %p44 = scmp.ne.s32.totalorder %s36, %s39
    %p45 = scmp.eq.s32.totalorder %s14, 0
    %p46 = por %p44, %p45
    %p47 = scmp.ne.s32.totalorder %s36, %s39
    %p48 = scmp.eq.s32.totalorder %s19, 7
    %p49 = por %p47, %p48
    %p50 = scmp.ne.s32.totalorder %s39, %s40
    %p51 = scmp.eq.s32.totalorder %s19, 0
    %p52 = por %p50, %p51
    %p53 = scmp.ne.s32.totalorder %s39, %s40
    %p54 = scmp.eq.s32.totalorder %s20, 7
    %p55 = por %p53, %p54
    %p57 = scmp.ne.s32.totalorder %s40, %s56
    %p58 = scmp.eq.s32.totalorder %s20, 0
    %p59 = por %p57, %p58
    %s60 = ssub.s32 %s21, %s33
    %s61 = ssub.s32 %s22, %s29
    %s62 = sor.u32 %s60, %s61
    %p63 = scmp.eq.s32.totalorder %s62, 0
    %s65 = sadd.s32 %s64, 1
    %s66 = scalar_select %p63, %s64, %s65
    %p69 = pneg %p63
    %p70 = scmp.eq.s32.totalorder %s14, 7
    %p71 = por %p69, %p70
    %p72 = scmp.ne.s32.totalorder %s64, %s67
    %p73 = scmp.eq.s32.totalorder %s14, 0
    %p74 = por %p72, %p73
    %p75 = scmp.ne.s32.totalorder %s64, %s67
    %p76 = scmp.eq.s32.totalorder %s19, 7
    %p77 = por %p75, %p76
    %p78 = scmp.ne.s32.totalorder %s67, %s68
    %p79 = scmp.eq.s32.totalorder %s19, 0
    %p80 = por %p78, %p79
    %p81 = scmp.ne.s32.totalorder %s67, %s68
    %p82 = scmp.eq.s32.totalorder %s20, 7
    %p83 = por %p81, %p82
    %p85 = scmp.ne.s32.totalorder %s68, %s84
    %p86 = scmp.eq.s32.totalorder %s20, 0
    %p87 = por %p85, %p86
    %s88 = ssub.s32 %s22, %s29
    %p89 = scmp.eq.s32.totalorder %s88, 0
    %s91 = sadd.s32 %s90, 1
    %s92 = scalar_select %p89, %s90, %s91
    %p95 = pneg %p89
    %p96 = scmp.eq.s32.totalorder %s14, 7
    %p97 = por %p95, %p96
    %p98 = scmp.ne.s32.totalorder %s90, %s93
    %p99 = scmp.eq.s32.totalorder %s14, 0
    %p100 = por %p98, %p99
    %p101 = scmp.ne.s32.totalorder %s90, %s93
    %p102 = scmp.eq.s32.totalorder %s19, 7
    %p103 = por %p101, %p102
    %p104 = scmp.ne.s32.totalorder %s93, %s94
    %p105 = scmp.eq.s32.totalorder %s19, 0
    %p106 = por %p104, %p105
    %p107 = scmp.ne.s32.totalorder %s93, %s94
    %p108 = scmp.eq.s32.totalorder %s20, 7
    %p109 = por %p107, %p108
    %p111 = scmp.ne.s32.totalorder %s94, %s110
    %p112 = scmp.eq.s32.totalorder %s20, 0
    %p113 = por %p111, %p112
    %s114 = ssub.s32 %s22, %s29
    %p115 = scmp.eq.s32.totalorder %s114, 0
    %s117 = sadd.s32 %s116, 1
    %s118 = scalar_select %p115, %s116, %s117
    %p121 = pneg %p115
    %p122 = scmp.eq.s32.totalorder %s14, 7
    %p123 = por %p121, %p122
    %p124 = scmp.ne.s32.totalorder %s116, %s119
    %p125 = scmp.eq.s32.totalorder %s14, 0
    %p126 = por %p124, %p125
    %p127 = scmp.ne.s32.totalorder %s116, %s119
    %p128 = scmp.eq.s32.totalorder %s19, 7
    %p129 = por %p127, %p128
    %p130 = scmp.ne.s32.totalorder %s119, %s120
    %p131 = scmp.eq.s32.totalorder %s19, 0
    %p132 = por %p130, %p131
    %p133 = scmp.ne.s32.totalorder %s119, %s120
    %p134 = scmp.eq.s32.totalorder %s20, 7
    %p135 = por %p133, %p134
    %p137 = scmp.ne.s32.totalorder %s120, %s136
    %p138 = scmp.eq.s32.totalorder %s20, 0
    %p139 = por %p137, %p138
    %s140 = ssub.s32 %s22, %s29
    %p141 = scmp.eq.s32.totalorder %s140, 0
    %s143 = sadd.s32 %s142, 1
    %s144 = scalar_select %p141, %s142, %s143
    %p147 = pneg %p141
    %p148 = scmp.eq.s32.totalorder %s14, 7
    %p149 = por %p147, %p148
    %p150 = scmp.ne.s32.totalorder %s142, %s145
    %p151 = scmp.eq.s32.totalorder %s14, 0
    %p152 = por %p150, %p151
    %p153 = scmp.ne.s32.totalorder %s142, %s145
    %p154 = scmp.eq.s32.totalorder %s19, 7
    %p155 = por %p153, %p154
    %p156 = scmp.ne.s32.totalorder %s145, %s146
    %p157 = scmp.eq.s32.totalorder %s19, 0
    %p158 = por %p156, %p157
    %p159 = scmp.ne.s32.totalorder %s145, %s146
    %p160 = scmp.eq.s32.totalorder %s20, 7
    %p161 = por %p159, %p160
    %p163 = scmp.ne.s32.totalorder %s146, %s162
    %p164 = scmp.eq.s32.totalorder %s20, 0
    %p165 = por %p163, %p164
    %s166 = ssub.s32 %s22, %s29
    %p167 = scmp.eq.s32.totalorder %s166, 0
    %s169 = sadd.s32 %s168, 1
    %s170 = scalar_select %p167, %s168, %s169
    %p173 = pneg %p167
    %p174 = scmp.eq.s32.totalorder %s14, 7
    %p175 = por %p173, %p174
    %p176 = scmp.ne.s32.totalorder %s168, %s171
    %p177 = scmp.eq.s32.totalorder %s14, 0
    %p178 = por %p176, %p177
    %p179 = scmp.ne.s32.totalorder %s168, %s171
    %p180 = scmp.eq.s32.totalorder %s19, 7
    %p181 = por %p179, %p180
    %p182 = scmp.ne.s32.totalorder %s171, %s172
    %p183 = scmp.eq.s32.totalorder %s19, 0
    %p184 = por %p182, %p183
    %p185 = scmp.ne.s32.totalorder %s171, %s172
    %p186 = scmp.eq.s32.totalorder %s20, 7
    %p187 = por %p185, %p186
    %p189 = scmp.ne.s32.totalorder %s172, %s188
    %p190 = scmp.eq.s32.totalorder %s20, 0
    %p191 = por %p189, %p190
    %s193 = sadd.s32 %s192, 1
    %p196 = scmp.eq.s32.totalorder %s14, 7
    %p197 = scmp.ne.s32.totalorder %s192, %s194
    %p198 = scmp.eq.s32.totalorder %s14, 0
    %p199 = por %p197, %p198
    %p200 = scmp.ne.s32.totalorder %s192, %s194
    %p201 = scmp.eq.s32.totalorder %s19, 7
    %p202 = por %p200, %p201
    %p203 = scmp.ne.s32.totalorder %s194, %s195
    %p204 = scmp.eq.s32.totalorder %s19, 0
    %p205 = por %p203, %p204
    %p206 = scmp.ne.s32.totalorder %s194, %s195
    %p207 = scmp.eq.s32.totalorder %s20, 7
    %p208 = por %p206, %p207
    %p210 = scmp.ne.s32.totalorder %s195, %s209
    %p211 = scmp.eq.s32.totalorder %s20, 0
    %p212 = por %p210, %p211
    %s213 = ssub.s32 %s21, %s33
    %p214 = scmp.eq.s32.totalorder %s213, 0
    %s216 = sadd.s32 %s215, 1
    %s217 = scalar_select %p214, %s215, %s216
    %p220 = pneg %p214
    %p221 = scmp.eq.s32.totalorder %s14, 7
    %p222 = por %p220, %p221
    %p223 = scmp.ne.s32.totalorder %s215, %s218
    %p224 = scmp.eq.s32.totalorder %s14, 0
    %p225 = por %p223, %p224
    %p226 = scmp.ne.s32.totalorder %s215, %s218
    %p227 = scmp.eq.s32.totalorder %s19, 7
    %p228 = por %p226, %p227
    %p229 = scmp.ne.s32.totalorder %s218, %s219
    %p230 = scmp.eq.s32.totalorder %s19, 0
    %p231 = por %p229, %p230
    %p232 = scmp.ne.s32.totalorder %s218, %s219
    %p233 = scmp.eq.s32.totalorder %s20, 7
    %p234 = por %p232, %p233
    %p236 = scmp.ne.s32.totalorder %s219, %s235
    %p237 = scmp.eq.s32.totalorder %s20, 0
    %p238 = por %p236, %p237
    %s239 = ssub.s32 %s21, %s33
    %s240 = ssub.s32 %s22, %s29
    %s241 = sor.u32 %s239, %s240
    %p242 = scmp.eq.s32.totalorder %s241, 0
    %s244 = sadd.s32 %s243, 1
    %s245 = scalar_select %p242, %s243, %s244
    %p248 = pneg %p242
    %p249 = scmp.eq.s32.totalorder %s14, 7
    %p250 = por %p248, %p249
    %p251 = scmp.ne.s32.totalorder %s243, %s246
    %p252 = scmp.eq.s32.totalorder %s14, 0
    %p253 = por %p251, %p252
    %p254 = scmp.ne.s32.totalorder %s243, %s246
    %p255 = scmp.eq.s32.totalorder %s19, 7
    %p256 = por %p254, %p255
    %p257 = scmp.ne.s32.totalorder %s246, %s247
    %p258 = scmp.eq.s32.totalorder %s19, 0
    %p259 = por %p257, %p258
    %p260 = scmp.ne.s32.totalorder %s246, %s247
    %p261 = scmp.eq.s32.totalorder %s20, 7
    %p262 = por %p260, %p261
    %p264 = scmp.ne.s32.totalorder %s247, %s263
    %p265 = scmp.eq.s32.totalorder %s20, 0
    %p266 = por %p264, %p265
    %p267 = scmp.le.s32.totalorder 1, %s14
    %p268 = scmp.lt.s32.totalorder %s14, 9
    %p269 = pnand %p267, %p268
    %p270 = pneg %p269
    // Predicated region
    $region9: #{tpu_custom_call.1} parent=5 // pred_check
      _
    $region10: #{tpu_custom_call.1} parent=5 // pred_check_branch
      %272 = sbr.rel (%p269) target = $region12
    $region11: #{tpu_custom_call.1} parent=5 // pred_region
      %s273 = ssub.s32 %s14, 1
      // Predicated region
      $region13: #{tpu_custom_call.1} parent=11 // pred_check
        %p274 = pneg %p205
      $region14: #{tpu_custom_call.1} parent=11 // pred_check_branch
        %276 = sbr.rel (%p274) target = $region16
      $region15: #{tpu_custom_call.1} parent=11 // pred_region
        _
      $region16: #{tpu_custom_call.1} parent=11 // pred_fallthru
        _
    $region12: #{tpu_custom_call.1} parent=5 // pred_fallthru
      _
    %p277 = scmp.lt.s32.totalorder %s14, 8
    // Predicated region
    $region17: #{tpu_custom_call.1} parent=5 // pred_check
      %p278 = pneg %p277
    $region18: #{tpu_custom_call.1} parent=5 // pred_check_branch
      %280 = sbr.rel (%p278) target = $region20
    $region19: #{tpu_custom_call.1} parent=5 // pred_region
      // Predicated region
      $region21: #{tpu_custom_call.1} parent=19 // pred_check
        %p281 = pneg %p46
      $region22: #{tpu_custom_call.1} parent=19 // pred_check_branch
        %283 = sbr.rel (%p281) target = $region24
      $region23: #{tpu_custom_call.1} parent=19 // pred_region
        %p284 = scmp.lt.s32.totalorder %s21, 1
        %s285 = scalar_select %p284, %s21, 1
        %s286 = smul.addr %s285, 8
        %s287 = smul.addr %s286, 8
        %s288 = scalar_lea.vmem %s0, %s287
      $region24: #{tpu_custom_call.1} parent=19 // pred_fallthru
        _
      // Predicated region
      $region25: #{tpu_custom_call.1} parent=19 // pred_check
        %p289 = pneg %p74
      $region26: #{tpu_custom_call.1} parent=19 // pred_check_branch
        %291 = sbr.rel (%p289) target = $region28
      $region27: #{tpu_custom_call.1} parent=19 // pred_region
        %p292 = scmp.lt.s32.totalorder %s21, 1
        %s293 = scalar_select %p292, %s21, 1
        %p294 = scmp.lt.s32.totalorder %s22, 3
        %s295 = scalar_select %p294, %s22, 3
        %s296 = smul.addr %s295, 8
        %s297 = smul.addr %s293, 32
        %s298 = sadd.s32 %s296, %s297
        %s299 = smul.addr %s298, 8
        %s300 = scalar_lea.vmem %s1, %s299
      $region28: #{tpu_custom_call.1} parent=19 // pred_fallthru
        _
      // Predicated region
      $region29: #{tpu_custom_call.1} parent=19 // pred_check
        %p301 = pneg %p100
      $region30: #{tpu_custom_call.1} parent=19 // pred_check_branch
        %303 = sbr.rel (%p301) target = $region32
      $region31: #{tpu_custom_call.1} parent=19 // pred_region
        %p304 = scmp.lt.s32.totalorder %s22, 3
        %s305 = scalar_select %p304, %s22, 3
        %s306 = smul.addr %s305, 4
        %s307 = smul.addr %s306, 8
        %s308 = scalar_lea.vmem %s2, %s307
      $region32: #{tpu_custom_call.1} parent=19 // pred_fallthru
        _
      // Predicated region
      $region33: #{tpu_custom_call.1} parent=19 // pred_check
        %p309 = pneg %p126
      $region34: #{tpu_custom_call.1} parent=19 // pred_check_branch
        %311 = sbr.rel (%p309) target = $region36
      $region35: #{tpu_custom_call.1} parent=19 // pred_region
        %p312 = scmp.lt.s32.totalorder %s22, 3
        %s313 = scalar_select %p312, %s22, 3
        %s314 = smul.addr %s313, 4
        %s315 = smul.addr %s314, 8
        %s316 = scalar_lea.vmem %s3, %s315
      $region36: #{tpu_custom_call.1} parent=19 // pred_fallthru
        _
      // Predicated region
      $region37: #{tpu_custom_call.1} parent=19 // pred_check
        %p317 = pneg %p152
      $region38: #{tpu_custom_call.1} parent=19 // pred_check_branch
        %319 = sbr.rel (%p317) target = $region40
      $region39: #{tpu_custom_call.1} parent=19 // pred_region
        %p320 = scmp.lt.s32.totalorder %s22, 3
        %s321 = scalar_select %p320, %s22, 3
        %s322 = scalar_lea.vmem %s4, %s321
      $region40: #{tpu_custom_call.1} parent=19 // pred_fallthru
        _
      // Predicated region
      $region41: #{tpu_custom_call.1} parent=19 // pred_check
        %p323 = pneg %p178
      $region42: #{tpu_custom_call.1} parent=19 // pred_check_branch
        %325 = sbr.rel (%p323) target = $region44
      $region43: #{tpu_custom_call.1} parent=19 // pred_region
        %p326 = scmp.lt.s32.totalorder %s22, 3
        %s327 = scalar_select %p326, %s22, 3
        %s328 = scalar_lea.vmem %s5, %s327
      $region44: #{tpu_custom_call.1} parent=19 // pred_fallthru
        _
      // Predicated region
      $region45: #{tpu_custom_call.1} parent=19 // pred_check
        %p329 = pneg %p225
      $region46: #{tpu_custom_call.1} parent=19 // pred_check_branch
        %331 = sbr.rel (%p329) target = $region48
      $region47: #{tpu_custom_call.1} parent=19 // pred_region
        %p332 = scmp.lt.s32.totalorder %s21, 1
        %s333 = scalar_select %p332, %s21, 1
        %s334 = scalar_lea.vmem %s7, %s333
      $region48: #{tpu_custom_call.1} parent=19 // pred_fallthru
        _
    $region20: #{tpu_custom_call.1} parent=5 // pred_fallthru
      _
    %p335 = scmp.le.s32.totalorder 1, %s14
    %p336 = scmp.lt.s32.totalorder %s14, 9
    %p337 = pnand %p335, %p336
    %p338 = pneg %p337
    // Predicated region
    $region49: #{tpu_custom_call.1} parent=5 // pred_check
      _
    $region50: #{tpu_custom_call.1} parent=5 // pred_check_branch
      %340 = sbr.rel (%p337) target = $region52
    $region51: #{tpu_custom_call.1} parent=5 // pred_region
      %s341 = ssub.s32 %s14, 1
      %p342 = scmp.lt.s32.totalorder %s23, 1
      %s343 = scalar_select %p342, %s23, 1
      %s344 = smul.addr %s343, 8
      %s345 = smul.addr %s344, 8
      %s346 = scalar_lea.vmem %s0, %s345
      %p347 = pneg %p52
      %p348 = pneg %p49
      %p349 = scmp.lt.s32.totalorder %s23, 1
      %s350 = scalar_select %p349, %s23, 1
      %p351 = scmp.lt.s32.totalorder %s24, 3
      %s352 = scalar_select %p351, %s24, 3
      %s353 = smul.addr %s352, 8
      %s354 = smul.addr %s350, 32
      %s355 = sadd.s32 %s353, %s354
      %s356 = smul.addr %s355, 8
      %s357 = scalar_lea.vmem %s1, %s356
      %p358 = pneg %p80
      %p359 = pneg %p77
      %p360 = scmp.lt.s32.totalorder %s24, 3
      %s361 = scalar_select %p360, %s24, 3
      %s362 = smul.addr %s361, 4
      %s363 = smul.addr %s362, 8
      %s364 = scalar_lea.vmem %s2, %s363
      %p365 = pneg %p106
      %p366 = pneg %p103
      %p367 = scmp.lt.s32.totalorder %s24, 3
      %s368 = scalar_select %p367, %s24, 3
      %s369 = smul.addr %s368, 4
      %s370 = smul.addr %s369, 8
      %s371 = scalar_lea.vmem %s3, %s370
      %p372 = pneg %p132
      %p373 = pneg %p129
      %p374 = scmp.lt.s32.totalorder %s24, 3
      %s375 = scalar_select %p374, %s24, 3
      %s376 = scalar_lea.vmem %s4, %s375
      %p377 = pneg %p158
      %p378 = pneg %p155
      %p379 = scmp.lt.s32.totalorder %s24, 3
      %s380 = scalar_select %p379, %s24, 3
      %s381 = scalar_lea.vmem %s5, %s380
      %p382 = pneg %p184
      %p383 = pneg %p181
      %p384 = pneg %p205
      %p385 = pneg %p202
      %p386 = scmp.lt.s32.totalorder %s23, 1
      %s387 = scalar_select %p386, %s23, 1
      %s388 = scalar_lea.vmem %s7, %s387
      %p389 = pneg %p231
      %p390 = pneg %p228
      %p391 = pneg %p259
      %p392 = pneg %p256
      %p393 = scmp.lt.s32.totalorder %s23, 1
      %s394 = scalar_select %p393, %s23, 1
      %p395 = scmp.lt.s32.totalorder %s24, 3
      %s396 = scalar_select %p395, %s24, 3
      %s397 = smul.addr %s396, 8
      %s398 = smul.addr %s394, 32
      %s399 = sadd.s32 %s397, %s398
      %s400 = smul.addr %s399, 8
      %s401 = scalar_lea.vmem %s8, %s400
      %p402 = scmp.lt.s32.totalorder %s23, 1
      %s403 = scalar_select %p402, %s23, 1
      %s404 = smul.addr %s403, 8
      %s405 = smul.addr %s404, 8
      %s406 = scalar_lea.vmem %s0, %s405
      %p407 = scmp.lt.s32.totalorder %s23, 1
      %s408 = scalar_select %p407, %s23, 1
      %p409 = scmp.lt.s32.totalorder %s24, 3
      %s410 = scalar_select %p409, %s24, 3
      %s411 = smul.addr %s410, 8
      %s412 = smul.addr %s408, 32
      %s413 = sadd.s32 %s411, %s412
      %s414 = smul.addr %s413, 8
      %s415 = scalar_lea.vmem %s1, %s414
      %p416 = scmp.lt.s32.totalorder %s24, 3
      %s417 = scalar_select %p416, %s24, 3
      %s418 = smul.addr %s417, 4
      %s419 = smul.addr %s418, 8
      %s420 = scalar_lea.vmem %s2, %s419
      %p421 = scmp.lt.s32.totalorder %s24, 3
      %s422 = scalar_select %p421, %s24, 3
      %s423 = smul.addr %s422, 4
      %s424 = smul.addr %s423, 8
      %s425 = scalar_lea.vmem %s3, %s424
      %p426 = scmp.lt.s32.totalorder %s24, 3
      %s427 = scalar_select %p426, %s24, 3
      %s428 = scalar_lea.vmem %s4, %s427
      %p429 = scmp.lt.s32.totalorder %s24, 3
      %s430 = scalar_select %p429, %s24, 3
      %s431 = scalar_lea.vmem %s5, %s430
      %p432 = scmp.lt.s32.totalorder %s23, 1
      %s433 = scalar_select %p432, %s23, 1
      %s434 = scalar_lea.vmem %s7, %s433
      %p435 = scmp.lt.s32.totalorder %s23, 1
      %s436 = scalar_select %p435, %s23, 1
      %p437 = scmp.lt.s32.totalorder %s24, 3
      %s438 = scalar_select %p437, %s24, 3
      %s439 = smul.addr %s438, 8
      %s440 = smul.addr %s436, 32
      %s441 = sadd.s32 %s439, %s440
      %s442 = smul.addr %s441, 8
      %s443 = scalar_lea.vmem %s8, %s442
      %v445 = vld [vmem:[%s406] sm:$0xff]
      %v446 = vld [vmem:[%s406 + $0x8] sm:$0xff]
      %v447 = vld [vmem:[%s406 + $0x10] sm:$0xff]
      %v448 = vld [vmem:[%s406 + $0x18] sm:$0xff]
      %v449 = vld [vmem:[%s406 + $0x20] sm:$0xff]
      %v450 = vld [vmem:[%s406 + $0x28] sm:$0xff]
      %v451 = vld [vmem:[%s406 + $0x30] sm:$0xff]
      %v452 = vld [vmem:[%s406 + $0x38] sm:$0xff]
      %v453 = vld [vmem:[%s415] sm:$0xff]
      %v454 = vld [vmem:[%s415 + $0x8] sm:$0xff]
      %v455 = vld [vmem:[%s415 + $0x10] sm:$0xff]
      %v456 = vld [vmem:[%s415 + $0x18] sm:$0xff]
      %v457 = vld [vmem:[%s415 + $0x20] sm:$0xff]
      %v458 = vld [vmem:[%s415 + $0x28] sm:$0xff]
      %v459 = vld [vmem:[%s415 + $0x30] sm:$0xff]
      %v460 = vld [vmem:[%s415 + $0x38] sm:$0xff]
      %v461 = vld [vmem:[%s6] sm:$0xff]
      %v462 = vld [vmem:[%s6 + $0x8] sm:$0xff]
      %v463 = vld [vmem:[%s6 + $0x10] sm:$0xff]
      %v464 = vld [vmem:[%s6 + $0x18] sm:$0xff]
      %v465 = vld [vmem:[%s6 + $0x20] sm:$0xff]
      %v466 = vld [vmem:[%s6 + $0x28] sm:$0xff]
      %v467 = vld [vmem:[%s6 + $0x30] sm:$0xff]
      %v468 = vld [vmem:[%s6 + $0x38] sm:$0xff]
      %v469 = vld [vmem:[%s6 + $0x40] sm:$0xff]
      %v470 = vld [vmem:[%s6 + $0x48] sm:$0xff]
      %v471 = vld [vmem:[%s6 + $0x50] sm:$0xff]
      %v472 = vld [vmem:[%s6 + $0x58] sm:$0xff]
      %v473 = vld [vmem:[%s6 + $0x60] sm:$0xff]
      %v474 = vld [vmem:[%s6 + $0x68] sm:$0xff]
      %v475 = vld [vmem:[%s6 + $0x70] sm:$0xff]
      %v476 = vld [vmem:[%s6 + $0x78] sm:$0xff]
      %v477 = vld [vmem:[%s428] sm:$0x1]
      %v478 = vld [vmem:[%s431] sm:$0x1]
      %v479 = vld [vmem:[%s434] sm:$0x1]
      %vm480 = vcmp.eq.s32.totalorder %v479, 0
      %v481 = vpack.c.bf16 %v446, %v445
      %v482 = vpack.c.bf16 %v448, %v447
      %v483 = vpack.c.bf16 %v450, %v449
      %v484 = vpack.c.bf16 %v452, %v451
      %v485 = vld [vmem:[%s420] sm:$0xff]
      %v486 = vld [vmem:[%s420 + $0x8] sm:$0xff]
      %v487 = vld [vmem:[%s420 + $0x10] sm:$0xff]
      %v488 = vld [vmem:[%s420 + $0x18] sm:$0xff]
      %v489 = vpack.c.bf16 %v486, %v485
      %v490 = vpack.c.bf16 %v488, %v487
      %vm491 = vcmask 261120
      %v493 = vsel %vm491, %v481, 0
      %v496 = vsel %vm491, %v482, 0
      %v499 = vsel %vm491, %v483, 0
      %v502 = vsel %vm491, %v484, 0
      %504 = vmatprep.subr.bf16.mxu0 0
      %505 = vmatpush1.bf16.msra.mxu0 %v489
      %506 = vmatprep.subr.bf16.mxu0 0
      %507 = vmatpush1.bf16.msra.mxu0 %v490
      %508 = vmatprep.subr.bf16.mxu0 0
      %509 = vmatpush1.bf16.msra.mxu0 0
      %510 = vmatprep.subr.bf16.mxu0 0
      %511 = vmatpush1.bf16.msra.mxu0 0
      %512 = vmatprep.subr.bf16.mxu0 0
      %513 = vmatpush1.bf16.msra.mxu0 0
      %514 = vmatprep.subr.bf16.mxu0 0
      %515 = vmatpush1.bf16.msra.mxu0 0
      %516 = vmatprep.subr.bf16.mxu0 0
      %517 = vmatpush1.bf16.msra.mxu0 0
      %518 = vmatprep.subr.bf16.mxu0 0
      %519 = vmatpush1.bf16.msra.mxu0 0
      %520 = vmatprep.subr.bf16.mxu0 0
      %521 = vmatpush1.bf16.msra.mxu0 0
      %522 = vmatprep.subr.bf16.mxu0 0
      %523 = vmatpush1.bf16.msra.mxu0 0
      %524 = vmatprep.subr.bf16.mxu0 0
      %525 = vmatpush1.bf16.msra.mxu0 0
      %526 = vmatprep.subr.bf16.mxu0 0
      %527 = vmatpush1.bf16.msra.mxu0 0
      %528 = vmatprep.subr.bf16.mxu0 0
      %529 = vmatpush1.bf16.msra.mxu0 0
      %530 = vmatprep.subr.bf16.mxu0 0
      %531 = vmatpush1.bf16.msra.mxu0 0
      %532 = vmatprep.subr.bf16.mxu0 0
      %533 = vmatpush1.bf16.msra.mxu0 0
      %534 = vmatprep.subr.bf16.mxu0 0
      %535 = vmatpush1.bf16.msra.mxu0 0
      %536 = vmatprep.mubr.bf16.mxu0 0
      %537 = vmatmul.mubr.bf16.gmra.mrb[0].mxu0 %v493
      %v538 = vpop.f32.mrb[0].mxu0
      %v539 = vadd.f32 0.0, %v538
      %v540 = vpop.f32.mrb[0].mxu0
      %v541 = vpop.f32.mrb[0].mxu0
      %v542 = vadd.f32 0.0, %v541
      %v543 = vpop.f32.mrb[0].mxu0
      %544 = vmatprep.mubr.bf16.mxu0 0
      %545 = vmatmul.mubr.bf16.gmra.mrb[0].mxu0 %v496
      %v546 = vpop.f32.mrb[0].mxu0
      %v547 = vadd.f32 0.0, %v546
      %v548 = vpop.f32.mrb[0].mxu0
      %v549 = vpop.f32.mrb[0].mxu0
      %v550 = vadd.f32 0.0, %v549
      %v551 = vpop.f32.mrb[0].mxu0
      %552 = vmatprep.mubr.bf16.mxu0 0
      %553 = vmatmul.mubr.bf16.gmra.mrb[0].mxu0 %v499
      %v554 = vpop.f32.mrb[0].mxu0
      %v555 = vadd.f32 0.0, %v554
      %v556 = vpop.f32.mrb[0].mxu0
      %v557 = vpop.f32.mrb[0].mxu0
      %v558 = vadd.f32 0.0, %v557
      %v559 = vpop.f32.mrb[0].mxu0
      %560 = vmatprep.mubr.bf16.mxu0 0
      %561 = vmatmul.mubr.bf16.gmra.mrb[0].mxu0 %v502
      %v562 = vpop.f32.mrb[0].mxu0
      %v563 = vadd.f32 0.0, %v562
      %v564 = vpop.f32.mrb[0].mxu0
      %v565 = vpop.f32.mrb[0].mxu0
      %v566 = vadd.f32 0.0, %v565
      %v567 = vpop.f32.mrb[0].mxu0
      %568 = vdwg.mxu0
      %v569 = vld [vmem:[%s425] sm:$0xff]
      %v570 = vld [vmem:[%s425 + $0x8] sm:$0xff]
      %v571 = vld [vmem:[%s425 + $0x10] sm:$0xff]
      %v572 = vld [vmem:[%s425 + $0x18] sm:$0xff]
      %v573 = vpack.c.bf16 %v570, %v569
      %v574 = vpack.c.bf16 %v572, %v571
      %575 = vmatprep.subr.bf16.mxu0 0
      %576 = vmatpush1.bf16.msra.mxu0 %v573
      %577 = vmatprep.subr.bf16.mxu0 0
      %578 = vmatpush1.bf16.msra.mxu0 %v574
      %579 = vmatprep.subr.bf16.mxu0 0
      %580 = vmatpush1.bf16.msra.mxu0 0
      %581 = vmatprep.subr.bf16.mxu0 0
      %582 = vmatpush1.bf16.msra.mxu0 0
      %583 = vmatprep.subr.bf16.mxu0 0
      %584 = vmatpush1.bf16.msra.mxu0 0
      %585 = vmatprep.subr.bf16.mxu0 0
      %586 = vmatpush1.bf16.msra.mxu0 0
      %587 = vmatprep.subr.bf16.mxu0 0
      %588 = vmatpush1.bf16.msra.mxu0 0
      %589 = vmatprep.subr.bf16.mxu0 0
      %590 = vmatpush1.bf16.msra.mxu0 0
      %591 = vmatprep.subr.bf16.mxu0 0
      %592 = vmatpush1.bf16.msra.mxu0 0
      %593 = vmatprep.subr.bf16.mxu0 0
      %594 = vmatpush1.bf16.msra.mxu0 0
      %595 = vmatprep.subr.bf16.mxu0 0
      %596 = vmatpush1.bf16.msra.mxu0 0
      %597 = vmatprep.subr.bf16.mxu0 0
      %598 = vmatpush1.bf16.msra.mxu0 0
      %599 = vmatprep.subr.bf16.mxu0 0
      %600 = vmatpush1.bf16.msra.mxu0 0
      %601 = vmatprep.subr.bf16.mxu0 0
      %602 = vmatpush1.bf16.msra.mxu0 0
      %603 = vmatprep.subr.bf16.mxu0 0
      %604 = vmatpush1.bf16.msra.mxu0 0
      %605 = vmatprep.subr.bf16.mxu0 0
      %606 = vmatpush1.bf16.msra.mxu0 0
      %607 = vmatprep.mubr.bf16.mxu0 0
      %608 = vmatmul.mubr.bf16.gmra.mrb[0].mxu0 %v493
      %v609 = vpop.f32.mrb[0].mxu0
      %v610 = vadd.f32 0.0, %v609
      %v611 = vpop.f32.mrb[0].mxu0
      %v612 = vpop.f32.mrb[0].mxu0
      %v613 = vadd.f32 0.0, %v612
      %v614 = vpop.f32.mrb[0].mxu0
      %615 = vmatprep.mubr.bf16.mxu0 0
      %616 = vmatmul.mubr.bf16.gmra.mrb[0].mxu0 %v496
      %v617 = vpop.f32.mrb[0].mxu0
      %v618 = vadd.f32 0.0, %v617
      %v619 = vpop.f32.mrb[0].mxu0
      %v620 = vpop.f32.mrb[0].mxu0
      %v621 = vadd.f32 0.0, %v620
      %v622 = vpop.f32.mrb[0].mxu0
      %623 = vmatprep.mubr.bf16.mxu0 0
      %624 = vmatmul.mubr.bf16.gmra.mrb[0].mxu0 %v499
      %v625 = vpop.f32.mrb[0].mxu0
      %v626 = vadd.f32 0.0, %v625
      %v627 = vpop.f32.mrb[0].mxu0
      %v628 = vpop.f32.mrb[0].mxu0
      %v629 = vadd.f32 0.0, %v628
      %v630 = vpop.f32.mrb[0].mxu0
      %631 = vmatprep.mubr.bf16.mxu0 0
      %632 = vmatmul.mubr.bf16.gmra.mrb[0].mxu0 %v502
      %v633 = vpop.f32.mrb[0].mxu0
      %v634 = vadd.f32 0.0, %v633
      %v635 = vpop.f32.mrb[0].mxu0
      %v636 = vpop.f32.mrb[0].mxu0
      %v637 = vadd.f32 0.0, %v636
      %v638 = vpop.f32.mrb[0].mxu0
      %639 = vdwg.mxu0
      %v641 = vlaneseq
      %v642 = vshrl.u32 %v641, 7
      %v643 = vsub.s32 0, %v642
      %v644 = vrot.slane %v477, %v643
      %v646 = vadd.f32 %v539, %v644
      %v647 = vadd.f32 %v542, %v644
      %v648 = vadd.f32 %v547, %v644
      %v649 = vadd.f32 %v550, %v644
      %v650 = vadd.f32 %v555, %v644
      %v651 = vadd.f32 %v558, %v644
      %v652 = vadd.f32 %v563, %v644
      %v653 = vadd.f32 %v566, %v644
      %v654 = vpack.c.bf16 %v647, %v646
      %v655 = vpack.c.bf16 %v649, %v648
      %v656 = vpack.c.bf16 %v651, %v650
      %v657 = vpack.c.bf16 %v653, %v652
      %v658 = vpack.c.bf16 %v454, %v453
      %v659 = vpack.c.bf16 %v456, %v455
      %v660 = vpack.c.bf16 %v458, %v457
      %v661 = vpack.c.bf16 %v460, %v459
      %v663 = vlaneseq
      %v664 = vshrl.u32 %v663, 7
      %v665 = vsub.s32 0, %v664
      %v666 = vrot.slane %v478, %v665
      %v668 = vadd.f32 %v539, %v666
      %v669 = vadd.f32 %v542, %v666
      %v670 = vadd.f32 %v547, %v666
      %v671 = vadd.f32 %v550, %v666
      %v672 = vadd.f32 %v555, %v666
      %v673 = vadd.f32 %v558, %v666
      %v674 = vadd.f32 %v563, %v666
      %v675 = vadd.f32 %v566, %v666
      %v676 = vpack.c.bf16 %v669, %v668
      %v677 = vpack.c.bf16 %v671, %v670
      %v678 = vpack.c.bf16 %v673, %v672
      %v679 = vpack.c.bf16 %v675, %v674
      %v680 = vpack.c.bf16 %v462, %v461
      %v681 = vpack.c.bf16 %v464, %v463
      %v682 = vpack.c.bf16 %v466, %v465
      %v683 = vpack.c.bf16 %v468, %v467
      %v684 = vpack.c.bf16 %v470, %v469
      %v685 = vpack.c.bf16 %v472, %v471
      %v686 = vpack.c.bf16 %v474, %v473
      %v687 = vpack.c.bf16 %v476, %v475
      %vm688 = vcmask 64512
      %v690 = vsel %vm688, %v676, 0
      %v693 = vsel %vm688, %v677, 0
      %v696 = vsel %vm688, %v678, 0
      %v699 = vsel %vm688, %v679, 0
      %v702 = vsel %vm688, %v680, 0
      %v705 = vsel %vm688, %v681, 0
      %v708 = vsel %vm688, %v682, 0
      %v711 = vsel %vm688, %v683, 0
      %v714 = vsel %vm688, %v684, 0
      %v717 = vsel %vm688, %v685, 0
      %v720 = vsel %vm688, %v686, 0
      %v723 = vsel %vm688, %v687, 0
      %725 = vmatprep.subr.bf16.mxu0 0
      %726 = vmatpush1.bf16.xpose.msra.mxu0 %v702
      %727 = vmatprep.subr.bf16.mxu0 0
      %728 = vmatpush1.bf16.xpose.msra.mxu0 %v705
      %729 = vmatprep.subr.bf16.mxu0 0
      %730 = vmatpush1.bf16.xpose.msra.mxu0 %v708
      %731 = vmatprep.subr.bf16.mxu0 0
      %732 = vmatpush1.bf16.xpose.msra.mxu0 %v711
      %733 = vmatprep.subr.bf16.mxu0 0
      %734 = vmatpush1.bf16.xpose.msra.mxu0 %v714
      %735 = vmatprep.subr.bf16.mxu0 0
      %736 = vmatpush1.bf16.xpose.msra.mxu0 %v717
      %737 = vmatprep.subr.bf16.mxu0 0
      %738 = vmatpush1.bf16.xpose.msra.mxu0 %v720
      %739 = vmatprep.subr.bf16.mxu0 0
      %740 = vmatpush1.bf16.xpose.msra.mxu0 %v723
      %741 = vmatprep.subr.bf16.mxu0 0
      %742 = vmatpush1.bf16.xpose.msra.mxu0 0
      %743 = vmatprep.subr.bf16.mxu0 0
      %744 = vmatpush1.bf16.xpose.msra.mxu0 0
      %745 = vmatprep.subr.bf16.mxu0 0
      %746 = vmatpush1.bf16.xpose.msra.mxu0 0
      %747 = vmatprep.subr.bf16.mxu0 0
      %748 = vmatpush1.bf16.xpose.msra.mxu0 0
      %749 = vmatprep.subr.bf16.mxu0 0
      %750 = vmatpush1.bf16.xpose.msra.mxu0 0
      %751 = vmatprep.subr.bf16.mxu0 0
      %752 = vmatpush1.bf16.xpose.msra.mxu0 0
      %753 = vmatprep.subr.bf16.mxu0 0
      %754 = vmatpush1.bf16.xpose.msra.mxu0 0
      %755 = vmatprep.subr.bf16.mxu0 0
      %756 = vmatpush1.bf16.xpose.msra.mxu0 0
      %757 = vmatprep.mubr.bf16.mxu0 0
      %758 = vmatmul.mubr.bf16.gmra.mrb[0].mxu0 %v690
      %v759 = vpop.f32.mrb[0].mxu0
      %v760 = vadd.f32 0.0, %v759
      %v761 = vpop.f32.mrb[0].mxu0
      %v762 = vpop.f32.mrb[0].mxu0
      %v763 = vadd.f32 0.0, %v762
      %v764 = vpop.f32.mrb[0].mxu0
      %765 = vmatprep.mubr.bf16.mxu0 0
      %766 = vmatmul.mubr.bf16.gmra.mrb[0].mxu0 %v693
      %v767 = vpop.f32.mrb[0].mxu0
      %v768 = vadd.f32 0.0, %v767
      %v769 = vpop.f32.mrb[0].mxu0
      %v770 = vpop.f32.mrb[0].mxu0
      %v771 = vadd.f32 0.0, %v770
      %v772 = vpop.f32.mrb[0].mxu0
      %773 = vmatprep.mubr.bf16.mxu0 0
      %774 = vmatmul.mubr.bf16.gmra.mrb[0].mxu0 %v696
      %v775 = vpop.f32.mrb[0].mxu0
      %v776 = vadd.f32 0.0, %v775
      %v777 = vpop.f32.mrb[0].mxu0
      %v778 = vpop.f32.mrb[0].mxu0
      %v779 = vadd.f32 0.0, %v778
      %v780 = vpop.f32.mrb[0].mxu0
      %781 = vmatprep.mubr.bf16.mxu0 0
      %782 = vmatmul.mubr.bf16.gmra.mrb[0].mxu0 %v699
      %v783 = vpop.f32.mrb[0].mxu0
      %v784 = vadd.f32 0.0, %v783
      %v785 = vpop.f32.mrb[0].mxu0
      %v786 = vpop.f32.mrb[0].mxu0
      %v787 = vadd.f32 0.0, %v786
      %v788 = vpop.f32.mrb[0].mxu0
      %789 = vdwg.mxu0
      %790 = vst [vmem:[#allocation2] sm:$0xff] %v760
      %791 = vst [vmem:[#allocation2 + $0x8] sm:$0xff] %v763
      %792 = vst [vmem:[#allocation2 + $0x10] sm:$0xff] %v768
      %793 = vst [vmem:[#allocation2 + $0x18] sm:$0xff] %v771
      %794 = vst [vmem:[#allocation2 + $0x20] sm:$0xff] %v776
      %795 = vst [vmem:[#allocation2 + $0x28] sm:$0xff] %v779
      %796 = vst [vmem:[#allocation2 + $0x30] sm:$0xff] %v784
      %797 = vst [vmem:[#allocation2 + $0x38] sm:$0xff] %v787
      %v798 = vlaneseq
      %v799 = vshrl.u32 %v798, 7
      %v800 = vadd.s32 %v799, 8
      %v801 = vadd.s32 %v799, 16
      %v802 = vadd.s32 %v799, 24
      %v803 = vadd.s32 %v799, 32
      %v804 = vadd.s32 %v799, 40
      %v805 = vadd.s32 %v799, 48
      %v806 = vadd.s32 %v799, 56
      %v807 = vsub.s32 64, %v799
      %v808 = vsub.s32 64, %v800
      %v809 = vsub.s32 64, %v801
      %v810 = vsub.s32 64, %v802
      %v811 = vsub.s32 64, %v803
      %v812 = vsub.s32 64, %v804
      %v813 = vsub.s32 64, %v805
      %v814 = vsub.s32 64, %v806
      %v815 = vand.u32 %v807, 1
      %v816 = vand.u32 %v808, 1
      %v817 = vand.u32 %v809, 1
      %v818 = vand.u32 %v810, 1
      %v819 = vand.u32 %v811, 1
      %v820 = vand.u32 %v812, 1
      %v821 = vand.u32 %v813, 1
      %v822 = vand.u32 %v814, 1
      %vm823 = vcmp.ne.s32.totalorder %v815, 0
      %vm824 = vcmp.ne.s32.totalorder %v816, 0
      %vm825 = vcmp.ne.s32.totalorder %v817, 0
      %vm826 = vcmp.ne.s32.totalorder %v818, 0
      %vm827 = vcmp.ne.s32.totalorder %v819, 0
      %vm828 = vcmp.ne.s32.totalorder %v820, 0
      %vm829 = vcmp.ne.s32.totalorder %v821, 0
      %vm830 = vcmp.ne.s32.totalorder %v822, 0
      %v831 = vld [vmem:[#allocation2] sm:$0xff]
      %v832 = vld [vmem:[#allocation2 + $0x8] sm:$0xff]
      %v833 = vld [vmem:[#allocation2 + $0x10] sm:$0xff]
      %v834 = vld [vmem:[#allocation2 + $0x18] sm:$0xff]
      %v835 = vld [vmem:[#allocation2 + $0x20] sm:$0xff]
      %v836 = vld [vmem:[#allocation2 + $0x28] sm:$0xff]
      %v837 = vld [vmem:[#allocation2 + $0x30] sm:$0xff]
      %v838 = vld [vmem:[#allocation2 + $0x38] sm:$0xff]
      %v839 = vsel %vm823, 1, 0
      %v840 = vsel %vm824, 1, 0
      %v841 = vsel %vm825, 1, 0
      %v842 = vsel %vm826, 1, 0
      %v843 = vsel %vm827, 1, 0
      %v844 = vsel %vm828, 1, 0
      %v845 = vsel %vm829, 1, 0
      %v846 = vsel %vm830, 1, 0
      %vm847 = vcmp.eq.s32.totalorder %v839, 1
      %vm848 = vcmp.eq.s32.totalorder %v840, 1
      %vm849 = vcmp.eq.s32.totalorder %v841, 1
      %vm850 = vcmp.eq.s32.totalorder %v842, 1
      %vm851 = vcmp.eq.s32.totalorder %v843, 1
      %vm852 = vcmp.eq.s32.totalorder %v844, 1
      %vm853 = vcmp.eq.s32.totalorder %v845, 1
      %vm854 = vcmp.eq.s32.totalorder %v846, 1
      %863 = vrot.lane.b32.xlu0 %v831, 1
      %v864 = vpop.permute.xlu0 %863
      %865 = vrot.lane.b32.xlu0 %v832, 1
      %v866 = vpop.permute.xlu0 %865
      %867 = vrot.lane.b32.xlu0 %v833, 1
      %v868 = vpop.permute.xlu0 %867
      %869 = vrot.lane.b32.xlu0 %v834, 1
      %v870 = vpop.permute.xlu0 %869
      %871 = vrot.lane.b32.xlu0 %v835, 1
      %v872 = vpop.permute.xlu0 %871
      %873 = vrot.lane.b32.xlu0 %v836, 1
      %v874 = vpop.permute.xlu0 %873
      %875 = vrot.lane.b32.xlu0 %v837, 1
      %v876 = vpop.permute.xlu0 %875
      %877 = vrot.lane.b32.xlu0 %v838, 1
      %v878 = vpop.permute.xlu0 %877
      %v887 = vsel %vm847, %v831, %v864
      %v888 = vsel %vm848, %v832, %v866
      %v889 = vsel %vm849, %v833, %v868
      %v890 = vsel %vm850, %v834, %v870
      %v891 = vsel %vm851, %v835, %v872
      %v892 = vsel %vm852, %v836, %v874
      %v893 = vsel %vm853, %v837, %v876
      %v894 = vsel %vm854, %v838, %v878
      %903 = vrot.lane.b32.xlu0 %v887, 127
      %v904 = vpop.permute.xlu0 %903
      %905 = vrot.lane.b32.xlu0 %v888, 127
      %v906 = vpop.permute.xlu0 %905
      %907 = vrot.lane.b32.xlu0 %v889, 127
      %v908 = vpop.permute.xlu0 %907
      %909 = vrot.lane.b32.xlu0 %v890, 127
      %v910 = vpop.permute.xlu0 %909
      %911 = vrot.lane.b32.xlu0 %v891, 127
      %v912 = vpop.permute.xlu0 %911
      %913 = vrot.lane.b32.xlu0 %v892, 127
      %v914 = vpop.permute.xlu0 %913
      %915 = vrot.lane.b32.xlu0 %v893, 127
      %v916 = vpop.permute.xlu0 %915
      %917 = vrot.lane.b32.xlu0 %v894, 127
      %v918 = vpop.permute.xlu0 %917
      %vm927 = vcmask 1039360
      %928 = vst.msk [vmem:[#allocation2] sm:$0xff] %vm927, %v904
      %929 = vst.msk [vmem:[#allocation2 + $0x8] sm:$0xff] %vm927, %v906
      %930 = vst.msk [vmem:[#allocation2 + $0x10] sm:$0xff] %vm927, %v908
      %931 = vst.msk [vmem:[#allocation2 + $0x18] sm:$0xff] %vm927, %v910
      %932 = vst.msk [vmem:[#allocation2 + $0x20] sm:$0xff] %vm927, %v912
      %933 = vst.msk [vmem:[#allocation2 + $0x28] sm:$0xff] %vm927, %v914
      %934 = vst.msk [vmem:[#allocation2 + $0x30] sm:$0xff] %vm927, %v916
      %935 = vst.msk [vmem:[#allocation2 + $0x38] sm:$0xff] %vm927, %v918
      %v936 = vand.u32 %v807, 2
      %v937 = vand.u32 %v808, 2
      %v938 = vand.u32 %v809, 2
      %v939 = vand.u32 %v810, 2
      %v940 = vand.u32 %v811, 2
      %v941 = vand.u32 %v812, 2
      %v942 = vand.u32 %v813, 2
      %v943 = vand.u32 %v814, 2
      %vm944 = vcmp.ne.s32.totalorder %v936, 0
      %vm945 = vcmp.ne.s32.totalorder %v937, 0
      %vm946 = vcmp.ne.s32.totalorder %v938, 0
      %vm947 = vcmp.ne.s32.totalorder %v939, 0
      %vm948 = vcmp.ne.s32.totalorder %v940, 0
      %vm949 = vcmp.ne.s32.totalorder %v941, 0
      %vm950 = vcmp.ne.s32.totalorder %v942, 0
      %vm951 = vcmp.ne.s32.totalorder %v943, 0
      %v952 = vld [vmem:[#allocation2] sm:$0xff]
      %v953 = vld [vmem:[#allocation2 + $0x8] sm:$0xff]
      %v954 = vld [vmem:[#allocation2 + $0x10] sm:$0xff]
      %v955 = vld [vmem:[#allocation2 + $0x18] sm:$0xff]
      %v956 = vld [vmem:[#allocation2 + $0x20] sm:$0xff]
      %v957 = vld [vmem:[#allocation2 + $0x28] sm:$0xff]
      %v958 = vld [vmem:[#allocation2 + $0x30] sm:$0xff]
      %v959 = vld [vmem:[#allocation2 + $0x38] sm:$0xff]
      %v960 = vsel %vm944, 1, 0
      %v961 = vsel %vm945, 1, 0
      %v962 = vsel %vm946, 1, 0
      %v963 = vsel %vm947, 1, 0
      %v964 = vsel %vm948, 1, 0
      %v965 = vsel %vm949, 1, 0
      %v966 = vsel %vm950, 1, 0
      %v967 = vsel %vm951, 1, 0
      %vm968 = vcmp.eq.s32.totalorder %v960, 1
      %vm969 = vcmp.eq.s32.totalorder %v961, 1
      %vm970 = vcmp.eq.s32.totalorder %v962, 1
      %vm971 = vcmp.eq.s32.totalorder %v963, 1
      %vm972 = vcmp.eq.s32.totalorder %v964, 1
      %vm973 = vcmp.eq.s32.totalorder %v965, 1
      %vm974 = vcmp.eq.s32.totalorder %v966, 1
      %vm975 = vcmp.eq.s32.totalorder %v967, 1
      %984 = vrot.lane.b32.xlu0 %v952, 2
      %v985 = vpop.permute.xlu0 %984
      %986 = vrot.lane.b32.xlu0 %v953, 2
      %v987 = vpop.permute.xlu0 %986
      %988 = vrot.lane.b32.xlu0 %v954, 2
      %v989 = vpop.permute.xlu0 %988
      %990 = vrot.lane.b32.xlu0 %v955, 2
      %v991 = vpop.permute.xlu0 %990
      %992 = vrot.lane.b32.xlu0 %v956, 2
      %v993 = vpop.permute.xlu0 %992
      %994 = vrot.lane.b32.xlu0 %v957, 2
      %v995 = vpop.permute.xlu0 %994
      %996 = vrot.lane.b32.xlu0 %v958, 2
      %v997 = vpop.permute.xlu0 %996
      %998 = vrot.lane.b32.xlu0 %v959, 2
      %v999 = vpop.permute.xlu0 %998
      %v1008 = vsel %vm968, %v952, %v985
      %v1009 = vsel %vm969, %v953, %v987
      %v1010 = vsel %vm970, %v954, %v989
      %v1011 = vsel %vm971, %v955, %v991
      %v1012 = vsel %vm972, %v956, %v993
      %v1013 = vsel %vm973, %v957, %v995
      %v1014 = vsel %vm974, %v958, %v997
      %v1015 = vsel %vm975, %v959, %v999
      %1024 = vrot.lane.b32.xlu0 %v1008, 126
      %v1025 = vpop.permute.xlu0 %1024
      %1026 = vrot.lane.b32.xlu0 %v1009, 126
      %v1027 = vpop.permute.xlu0 %1026
      %1028 = vrot.lane.b32.xlu0 %v1010, 126
      %v1029 = vpop.permute.xlu0 %1028
      %1030 = vrot.lane.b32.xlu0 %v1011, 126
      %v1031 = vpop.permute.xlu0 %1030
      %1032 = vrot.lane.b32.xlu0 %v1012, 126
      %v1033 = vpop.permute.xlu0 %1032
      %1034 = vrot.lane.b32.xlu0 %v1013, 126
      %v1035 = vpop.permute.xlu0 %1034
      %1036 = vrot.lane.b32.xlu0 %v1014, 126
      %v1037 = vpop.permute.xlu0 %1036
      %1038 = vrot.lane.b32.xlu0 %v1015, 126
      %v1039 = vpop.permute.xlu0 %1038
      %vm1048 = vcmask 1031168
      %1049 = vst.msk [vmem:[#allocation2] sm:$0xff] %vm1048, %v1025
      %1050 = vst.msk [vmem:[#allocation2 + $0x8] sm:$0xff] %vm1048, %v1027
      %1051 = vst.msk [vmem:[#allocation2 + $0x10] sm:$0xff] %vm1048, %v1029
      %1052 = vst.msk [vmem:[#allocation2 + $0x18] sm:$0xff] %vm1048, %v1031
      %1053 = vst.msk [vmem:[#allocation2 + $0x20] sm:$0xff] %vm1048, %v1033
      %1054 = vst.msk [vmem:[#allocation2 + $0x28] sm:$0xff] %vm1048, %v1035
      %1055 = vst.msk [vmem:[#allocation2 + $0x30] sm:$0xff] %vm1048, %v1037
      %1056 = vst.msk [vmem:[#allocation2 + $0x38] sm:$0xff] %vm1048, %v1039
      %v1057 = vand.u32 %v807, 4
      %v1058 = vand.u32 %v808, 4
      %v1059 = vand.u32 %v809, 4
      %v1060 = vand.u32 %v810, 4
      %v1061 = vand.u32 %v811, 4
      %v1062 = vand.u32 %v812, 4
      %v1063 = vand.u32 %v813, 4
      %v1064 = vand.u32 %v814, 4
      %vm1065 = vcmp.ne.s32.totalorder %v1057, 0
      %vm1066 = vcmp.ne.s32.totalorder %v1058, 0
      %vm1067 = vcmp.ne.s32.totalorder %v1059, 0
      %vm1068 = vcmp.ne.s32.totalorder %v1060, 0
      %vm1069 = vcmp.ne.s32.totalorder %v1061, 0
      %vm1070 = vcmp.ne.s32.totalorder %v1062, 0
      %vm1071 = vcmp.ne.s32.totalorder %v1063, 0
      %vm1072 = vcmp.ne.s32.totalorder %v1064, 0
      %v1073 = vld [vmem:[#allocation2] sm:$0xff]
      %v1074 = vld [vmem:[#allocation2 + $0x8] sm:$0xff]
      %v1075 = vld [vmem:[#allocation2 + $0x10] sm:$0xff]
      %v1076 = vld [vmem:[#allocation2 + $0x18] sm:$0xff]
      %v1077 = vld [vmem:[#allocation2 + $0x20] sm:$0xff]
      %v1078 = vld [vmem:[#allocation2 + $0x28] sm:$0xff]
      %v1079 = vld [vmem:[#allocation2 + $0x30] sm:$0xff]
      %v1080 = vld [vmem:[#allocation2 + $0x38] sm:$0xff]
      %v1081 = vsel %vm1065, 1, 0
      %v1082 = vsel %vm1066, 1, 0
      %v1083 = vsel %vm1067, 1, 0
      %v1084 = vsel %vm1068, 1, 0
      %v1085 = vsel %vm1069, 1, 0
      %v1086 = vsel %vm1070, 1, 0
      %v1087 = vsel %vm1071, 1, 0
      %v1088 = vsel %vm1072, 1, 0
      %vm1089 = vcmp.eq.s32.totalorder %v1081, 1
      %vm1090 = vcmp.eq.s32.totalorder %v1082, 1
      %vm1091 = vcmp.eq.s32.totalorder %v1083, 1
      %vm1092 = vcmp.eq.s32.totalorder %v1084, 1
      %vm1093 = vcmp.eq.s32.totalorder %v1085, 1
      %vm1094 = vcmp.eq.s32.totalorder %v1086, 1
      %vm1095 = vcmp.eq.s32.totalorder %v1087, 1
      %vm1096 = vcmp.eq.s32.totalorder %v1088, 1
      %1105 = vrot.lane.b32.xlu0 %v1073, 4
      %v1106 = vpop.permute.xlu0 %1105
      %1107 = vrot.lane.b32.xlu0 %v1074, 4
      %v1108 = vpop.permute.xlu0 %1107
      %1109 = vrot.lane.b32.xlu0 %v1075, 4
      %v1110 = vpop.permute.xlu0 %1109
      %1111 = vrot.lane.b32.xlu0 %v1076, 4
      %v1112 = vpop.permute.xlu0 %1111
      %1113 = vrot.lane.b32.xlu0 %v1077, 4
      %v1114 = vpop.permute.xlu0 %1113
      %1115 = vrot.lane.b32.xlu0 %v1078, 4
      %v1116 = vpop.permute.xlu0 %1115
      %1117 = vrot.lane.b32.xlu0 %v1079, 4
      %v1118 = vpop.permute.xlu0 %1117
      %1119 = vrot.lane.b32.xlu0 %v1080, 4
      %v1120 = vpop.permute.xlu0 %1119
      %v1129 = vsel %vm1089, %v1073, %v1106
      %v1130 = vsel %vm1090, %v1074, %v1108
      %v1131 = vsel %vm1091, %v1075, %v1110
      %v1132 = vsel %vm1092, %v1076, %v1112
      %v1133 = vsel %vm1093, %v1077, %v1114
      %v1134 = vsel %vm1094, %v1078, %v1116
      %v1135 = vsel %vm1095, %v1079, %v1118
      %v1136 = vsel %vm1096, %v1080, %v1120
      %1145 = vrot.lane.b32.xlu0 %v1129, 124
      %v1146 = vpop.permute.xlu0 %1145
      %1147 = vrot.lane.b32.xlu0 %v1130, 124
      %v1148 = vpop.permute.xlu0 %1147
      %1149 = vrot.lane.b32.xlu0 %v1131, 124
      %v1150 = vpop.permute.xlu0 %1149
      %1151 = vrot.lane.b32.xlu0 %v1132, 124
      %v1152 = vpop.permute.xlu0 %1151
      %1153 = vrot.lane.b32.xlu0 %v1133, 124
      %v1154 = vpop.permute.xlu0 %1153
      %1155 = vrot.lane.b32.xlu0 %v1134, 124
      %v1156 = vpop.permute.xlu0 %1155
      %1157 = vrot.lane.b32.xlu0 %v1135, 124
      %v1158 = vpop.permute.xlu0 %1157
      %1159 = vrot.lane.b32.xlu0 %v1136, 124
      %v1160 = vpop.permute.xlu0 %1159
      %vm1169 = vcmask 1014784
      %1170 = vst.msk [vmem:[#allocation2] sm:$0xff] %vm1169, %v1146
      %1171 = vst.msk [vmem:[#allocation2 + $0x8] sm:$0xff] %vm1169, %v1148
      %1172 = vst.msk [vmem:[#allocation2 + $0x10] sm:$0xff] %vm1169, %v1150
      %1173 = vst.msk [vmem:[#allocation2 + $0x18] sm:$0xff] %vm1169, %v1152
      %1174 = vst.msk [vmem:[#allocation2 + $0x20] sm:$0xff] %vm1169, %v1154
      %1175 = vst.msk [vmem:[#allocation2 + $0x28] sm:$0xff] %vm1169, %v1156
      %1176 = vst.msk [vmem:[#allocation2 + $0x30] sm:$0xff] %vm1169, %v1158
      %1177 = vst.msk [vmem:[#allocation2 + $0x38] sm:$0xff] %vm1169, %v1160
      %v1178 = vand.u32 %v807, 8
      %v1179 = vand.u32 %v808, 8
      %v1180 = vand.u32 %v809, 8
      %v1181 = vand.u32 %v810, 8
      %v1182 = vand.u32 %v811, 8
      %v1183 = vand.u32 %v812, 8
      %v1184 = vand.u32 %v813, 8
      %v1185 = vand.u32 %v814, 8
      %vm1186 = vcmp.ne.s32.totalorder %v1178, 0
      %vm1187 = vcmp.ne.s32.totalorder %v1179, 0
      %vm1188 = vcmp.ne.s32.totalorder %v1180, 0
      %vm1189 = vcmp.ne.s32.totalorder %v1181, 0
      %vm1190 = vcmp.ne.s32.totalorder %v1182, 0
      %vm1191 = vcmp.ne.s32.totalorder %v1183, 0
      %vm1192 = vcmp.ne.s32.totalorder %v1184, 0
      %vm1193 = vcmp.ne.s32.totalorder %v1185, 0
      %v1194 = vld [vmem:[#allocation2] sm:$0xff]
      %v1195 = vld [vmem:[#allocation2 + $0x8] sm:$0xff]
      %v1196 = vld [vmem:[#allocation2 + $0x10] sm:$0xff]
      %v1197 = vld [vmem:[#allocation2 + $0x18] sm:$0xff]
      %v1198 = vld [vmem:[#allocation2 + $0x20] sm:$0xff]
      %v1199 = vld [vmem:[#allocation2 + $0x28] sm:$0xff]
      %v1200 = vld [vmem:[#allocation2 + $0x30] sm:$0xff]
      %v1201 = vld [vmem:[#allocation2 + $0x38] sm:$0xff]
      %v1202 = vsel %vm1186, 1, 0
      %v1203 = vsel %vm1187, 1, 0
      %v1204 = vsel %vm1188, 1, 0
      %v1205 = vsel %vm1189, 1, 0
      %v1206 = vsel %vm1190, 1, 0
      %v1207 = vsel %vm1191, 1, 0
      %v1208 = vsel %vm1192, 1, 0
      %v1209 = vsel %vm1193, 1, 0
      %vm1210 = vcmp.eq.s32.totalorder %v1202, 1
      %vm1211 = vcmp.eq.s32.totalorder %v1203, 1
      %vm1212 = vcmp.eq.s32.totalorder %v1204, 1
      %vm1213 = vcmp.eq.s32.totalorder %v1205, 1
      %vm1214 = vcmp.eq.s32.totalorder %v1206, 1
      %vm1215 = vcmp.eq.s32.totalorder %v1207, 1
      %vm1216 = vcmp.eq.s32.totalorder %v1208, 1
      %vm1217 = vcmp.eq.s32.totalorder %v1209, 1
      %1226 = vrot.lane.b32.xlu0 %v1194, 8
      %v1227 = vpop.permute.xlu0 %1226
      %1228 = vrot.lane.b32.xlu0 %v1195, 8
      %v1229 = vpop.permute.xlu0 %1228
      %1230 = vrot.lane.b32.xlu0 %v1196, 8
      %v1231 = vpop.permute.xlu0 %1230
      %1232 = vrot.lane.b32.xlu0 %v1197, 8
      %v1233 = vpop.permute.xlu0 %1232
      %1234 = vrot.lane.b32.xlu0 %v1198, 8
      %v1235 = vpop.permute.xlu0 %1234
      %1236 = vrot.lane.b32.xlu0 %v1199, 8
      %v1237 = vpop.permute.xlu0 %1236
      %1238 = vrot.lane.b32.xlu0 %v1200, 8
      %v1239 = vpop.permute.xlu0 %1238
      %1240 = vrot.lane.b32.xlu0 %v1201, 8
      %v1241 = vpop.permute.xlu0 %1240
      %v1250 = vsel %vm1210, %v1194, %v1227
      %v1251 = vsel %vm1211, %v1195, %v1229
      %v1252 = vsel %vm1212, %v1196, %v1231
      %v1253 = vsel %vm1213, %v1197, %v1233
      %v1254 = vsel %vm1214, %v1198, %v1235
      %v1255 = vsel %vm1215, %v1199, %v1237
      %v1256 = vsel %vm1216, %v1200, %v1239
      %v1257 = vsel %vm1217, %v1201, %v1241
      %1266 = vrot.lane.b32.xlu0 %v1250, 120
      %v1267 = vpop.permute.xlu0 %1266
      %1268 = vrot.lane.b32.xlu0 %v1251, 120
      %v1269 = vpop.permute.xlu0 %1268
      %1270 = vrot.lane.b32.xlu0 %v1252, 120
      %v1271 = vpop.permute.xlu0 %1270
      %1272 = vrot.lane.b32.xlu0 %v1253, 120
      %v1273 = vpop.permute.xlu0 %1272
      %1274 = vrot.lane.b32.xlu0 %v1254, 120
      %v1275 = vpop.permute.xlu0 %1274
      %1276 = vrot.lane.b32.xlu0 %v1255, 120
      %v1277 = vpop.permute.xlu0 %1276
      %1278 = vrot.lane.b32.xlu0 %v1256, 120
      %v1279 = vpop.permute.xlu0 %1278
      %1280 = vrot.lane.b32.xlu0 %v1257, 120
      %v1281 = vpop.permute.xlu0 %1280
      %vm1290 = vcmask 982016
      %1291 = vst.msk [vmem:[#allocation2] sm:$0xff] %vm1290, %v1267
      %1292 = vst.msk [vmem:[#allocation2 + $0x8] sm:$0xff] %vm1290, %v1269
      %1293 = vst.msk [vmem:[#allocation2 + $0x10] sm:$0xff] %vm1290, %v1271
      %1294 = vst.msk [vmem:[#allocation2 + $0x18] sm:$0xff] %vm1290, %v1273
      %1295 = vst.msk [vmem:[#allocation2 + $0x20] sm:$0xff] %vm1290, %v1275
      %1296 = vst.msk [vmem:[#allocation2 + $0x28] sm:$0xff] %vm1290, %v1277
      %1297 = vst.msk [vmem:[#allocation2 + $0x30] sm:$0xff] %vm1290, %v1279
      %1298 = vst.msk [vmem:[#allocation2 + $0x38] sm:$0xff] %vm1290, %v1281
      %v1299 = vand.u32 %v807, 16
      %v1300 = vand.u32 %v808, 16
      %v1301 = vand.u32 %v809, 16
      %v1302 = vand.u32 %v810, 16
      %v1303 = vand.u32 %v811, 16
      %v1304 = vand.u32 %v812, 16
      %v1305 = vand.u32 %v813, 16
      %v1306 = vand.u32 %v814, 16
      %vm1307 = vcmp.ne.s32.totalorder %v1299, 0
      %vm1308 = vcmp.ne.s32.totalorder %v1300, 0
      %vm1309 = vcmp.ne.s32.totalorder %v1301, 0
      %vm1310 = vcmp.ne.s32.totalorder %v1302, 0
      %vm1311 = vcmp.ne.s32.totalorder %v1303, 0
      %vm1312 = vcmp.ne.s32.totalorder %v1304, 0
      %vm1313 = vcmp.ne.s32.totalorder %v1305, 0
      %vm1314 = vcmp.ne.s32.totalorder %v1306, 0
      %v1315 = vld [vmem:[#allocation2] sm:$0xff]
      %v1316 = vld [vmem:[#allocation2 + $0x8] sm:$0xff]
      %v1317 = vld [vmem:[#allocation2 + $0x10] sm:$0xff]
      %v1318 = vld [vmem:[#allocation2 + $0x18] sm:$0xff]
      %v1319 = vld [vmem:[#allocation2 + $0x20] sm:$0xff]
      %v1320 = vld [vmem:[#allocation2 + $0x28] sm:$0xff]
      %v1321 = vld [vmem:[#allocation2 + $0x30] sm:$0xff]
      %v1322 = vld [vmem:[#allocation2 + $0x38] sm:$0xff]
      %v1323 = vsel %vm1307, 1, 0
      %v1324 = vsel %vm1308, 1, 0
      %v1325 = vsel %vm1309, 1, 0
      %v1326 = vsel %vm1310, 1, 0
      %v1327 = vsel %vm1311, 1, 0
      %v1328 = vsel %vm1312, 1, 0
      %v1329 = vsel %vm1313, 1, 0
      %v1330 = vsel %vm1314, 1, 0
      %vm1331 = vcmp.eq.s32.totalorder %v1323, 1
      %vm1332 = vcmp.eq.s32.totalorder %v1324, 1
      %vm1333 = vcmp.eq.s32.totalorder %v1325, 1
      %vm1334 = vcmp.eq.s32.totalorder %v1326, 1
      %vm1335 = vcmp.eq.s32.totalorder %v1327, 1
      %vm1336 = vcmp.eq.s32.totalorder %v1328, 1
      %vm1337 = vcmp.eq.s32.totalorder %v1329, 1
      %vm1338 = vcmp.eq.s32.totalorder %v1330, 1
      %1347 = vrot.lane.b32.xlu0 %v1315, 16
      %v1348 = vpop.permute.xlu0 %1347
      %1349 = vrot.lane.b32.xlu0 %v1316, 16
      %v1350 = vpop.permute.xlu0 %1349
      %1351 = vrot.lane.b32.xlu0 %v1317, 16
      %v1352 = vpop.permute.xlu0 %1351
      %1353 = vrot.lane.b32.xlu0 %v1318, 16
      %v1354 = vpop.permute.xlu0 %1353
      %1355 = vrot.lane.b32.xlu0 %v1319, 16
      %v1356 = vpop.permute.xlu0 %1355
      %1357 = vrot.lane.b32.xlu0 %v1320, 16
      %v1358 = vpop.permute.xlu0 %1357
      %1359 = vrot.lane.b32.xlu0 %v1321, 16
      %v1360 = vpop.permute.xlu0 %1359
      %1361 = vrot.lane.b32.xlu0 %v1322, 16
      %v1362 = vpop.permute.xlu0 %1361
      %v1371 = vsel %vm1331, %v1315, %v1348
      %v1372 = vsel %vm1332, %v1316, %v1350
      %v1373 = vsel %vm1333, %v1317, %v1352
      %v1374 = vsel %vm1334, %v1318, %v1354
      %v1375 = vsel %vm1335, %v1319, %v1356
      %v1376 = vsel %vm1336, %v1320, %v1358
      %v1377 = vsel %vm1337, %v1321, %v1360
      %v1378 = vsel %vm1338, %v1322, %v1362
      %1387 = vrot.lane.b32.xlu0 %v1371, 112
      %v1388 = vpop.permute.xlu0 %1387
      %1389 = vrot.lane.b32.xlu0 %v1372, 112
      %v1390 = vpop.permute.xlu0 %1389
      %1391 = vrot.lane.b32.xlu0 %v1373, 112
      %v1392 = vpop.permute.xlu0 %1391
      %1393 = vrot.lane.b32.xlu0 %v1374, 112
      %v1394 = vpop.permute.xlu0 %1393
      %1395 = vrot.lane.b32.xlu0 %v1375, 112
      %v1396 = vpop.permute.xlu0 %1395
      %1397 = vrot.lane.b32.xlu0 %v1376, 112
      %v1398 = vpop.permute.xlu0 %1397
      %1399 = vrot.lane.b32.xlu0 %v1377, 112
      %v1400 = vpop.permute.xlu0 %1399
      %1401 = vrot.lane.b32.xlu0 %v1378, 112
      %v1402 = vpop.permute.xlu0 %1401
      %vm1411 = vcmask 916480
      %1412 = vst.msk [vmem:[#allocation2] sm:$0xff] %vm1411, %v1388
      %1413 = vst.msk [vmem:[#allocation2 + $0x8] sm:$0xff] %vm1411, %v1390
      %1414 = vst.msk [vmem:[#allocation2 + $0x10] sm:$0xff] %vm1411, %v1392
      %1415 = vst.msk [vmem:[#allocation2 + $0x18] sm:$0xff] %vm1411, %v1394
      %1416 = vst.msk [vmem:[#allocation2 + $0x20] sm:$0xff] %vm1411, %v1396
      %1417 = vst.msk [vmem:[#allocation2 + $0x28] sm:$0xff] %vm1411, %v1398
      %1418 = vst.msk [vmem:[#allocation2 + $0x30] sm:$0xff] %vm1411, %v1400
      %1419 = vst.msk [vmem:[#allocation2 + $0x38] sm:$0xff] %vm1411, %v1402
      %v1420 = vand.u32 %v807, 32
      %v1421 = vand.u32 %v808, 32
      %v1422 = vand.u32 %v809, 32
      %v1423 = vand.u32 %v810, 32
      %v1424 = vand.u32 %v811, 32
      %v1425 = vand.u32 %v812, 32
      %v1426 = vand.u32 %v813, 32
      %v1427 = vand.u32 %v814, 32
      %vm1428 = vcmp.ne.s32.totalorder %v1420, 0
      %vm1429 = vcmp.ne.s32.totalorder %v1421, 0
      %vm1430 = vcmp.ne.s32.totalorder %v1422, 0
      %vm1431 = vcmp.ne.s32.totalorder %v1423, 0
      %vm1432 = vcmp.ne.s32.totalorder %v1424, 0
      %vm1433 = vcmp.ne.s32.totalorder %v1425, 0
      %vm1434 = vcmp.ne.s32.totalorder %v1426, 0
      %vm1435 = vcmp.ne.s32.totalorder %v1427, 0
      %v1436 = vld [vmem:[#allocation2] sm:$0xff]
      %v1437 = vld [vmem:[#allocation2 + $0x8] sm:$0xff]
      %v1438 = vld [vmem:[#allocation2 + $0x10] sm:$0xff]
      %v1439 = vld [vmem:[#allocation2 + $0x18] sm:$0xff]
      %v1440 = vld [vmem:[#allocation2 + $0x20] sm:$0xff]
      %v1441 = vld [vmem:[#allocation2 + $0x28] sm:$0xff]
      %v1442 = vld [vmem:[#allocation2 + $0x30] sm:$0xff]
      %v1443 = vld [vmem:[#allocation2 + $0x38] sm:$0xff]
      %v1444 = vsel %vm1428, 1, 0
      %v1445 = vsel %vm1429, 1, 0
      %v1446 = vsel %vm1430, 1, 0
      %v1447 = vsel %vm1431, 1, 0
      %v1448 = vsel %vm1432, 1, 0
      %v1449 = vsel %vm1433, 1, 0
      %v1450 = vsel %vm1434, 1, 0
      %v1451 = vsel %vm1435, 1, 0
      %vm1452 = vcmp.eq.s32.totalorder %v1444, 1
      %vm1453 = vcmp.eq.s32.totalorder %v1445, 1
      %vm1454 = vcmp.eq.s32.totalorder %v1446, 1
      %vm1455 = vcmp.eq.s32.totalorder %v1447, 1
      %vm1456 = vcmp.eq.s32.totalorder %v1448, 1
      %vm1457 = vcmp.eq.s32.totalorder %v1449, 1
      %vm1458 = vcmp.eq.s32.totalorder %v1450, 1
      %vm1459 = vcmp.eq.s32.totalorder %v1451, 1
      %1468 = vrot.lane.b32.xlu0 %v1436, 32
      %v1469 = vpop.permute.xlu0 %1468
      %1470 = vrot.lane.b32.xlu0 %v1437, 32
      %v1471 = vpop.permute.xlu0 %1470
      %1472 = vrot.lane.b32.xlu0 %v1438, 32
      %v1473 = vpop.permute.xlu0 %1472
      %1474 = vrot.lane.b32.xlu0 %v1439, 32
      %v1475 = vpop.permute.xlu0 %1474
      %1476 = vrot.lane.b32.xlu0 %v1440, 32
      %v1477 = vpop.permute.xlu0 %1476
      %1478 = vrot.lane.b32.xlu0 %v1441, 32
      %v1479 = vpop.permute.xlu0 %1478
      %1480 = vrot.lane.b32.xlu0 %v1442, 32
      %v1481 = vpop.permute.xlu0 %1480
      %1482 = vrot.lane.b32.xlu0 %v1443, 32
      %v1483 = vpop.permute.xlu0 %1482
      %v1492 = vsel %vm1452, %v1436, %v1469
      %v1493 = vsel %vm1453, %v1437, %v1471
      %v1494 = vsel %vm1454, %v1438, %v1473
      %v1495 = vsel %vm1455, %v1439, %v1475
      %v1496 = vsel %vm1456, %v1440, %v1477
      %v1497 = vsel %vm1457, %v1441, %v1479
      %v1498 = vsel %vm1458, %v1442, %v1481
      %v1499 = vsel %vm1459, %v1443, %v1483
      %1508 = vrot.lane.b32.xlu0 %v1492, 96
      %v1509 = vpop.permute.xlu0 %1508
      %1510 = vrot.lane.b32.xlu0 %v1493, 96
      %v1511 = vpop.permute.xlu0 %1510
      %1512 = vrot.lane.b32.xlu0 %v1494, 96
      %v1513 = vpop.permute.xlu0 %1512
      %1514 = vrot.lane.b32.xlu0 %v1495, 96
      %v1515 = vpop.permute.xlu0 %1514
      %1516 = vrot.lane.b32.xlu0 %v1496, 96
      %v1517 = vpop.permute.xlu0 %1516
      %1518 = vrot.lane.b32.xlu0 %v1497, 96
      %v1519 = vpop.permute.xlu0 %1518
      %1520 = vrot.lane.b32.xlu0 %v1498, 96
      %v1521 = vpop.permute.xlu0 %1520
      %1522 = vrot.lane.b32.xlu0 %v1499, 96
      %v1523 = vpop.permute.xlu0 %1522
      %vm1532 = vcmask 785408
      %1533 = vst.msk [vmem:[#allocation2] sm:$0xff] %vm1532, %v1509
      %1534 = vst.msk [vmem:[#allocation2 + $0x8] sm:$0xff] %vm1532, %v1511
      %1535 = vst.msk [vmem:[#allocation2 + $0x10] sm:$0xff] %vm1532, %v1513
      %1536 = vst.msk [vmem:[#allocation2 + $0x18] sm:$0xff] %vm1532, %v1515
      %1537 = vst.msk [vmem:[#allocation2 + $0x20] sm:$0xff] %vm1532, %v1517
      %1538 = vst.msk [vmem:[#allocation2 + $0x28] sm:$0xff] %vm1532, %v1519
      %1539 = vst.msk [vmem:[#allocation2 + $0x30] sm:$0xff] %vm1532, %v1521
      %1540 = vst.msk [vmem:[#allocation2 + $0x38] sm:$0xff] %vm1532, %v1523
      %v1541 = vand.u32 %v807, 64
      %v1542 = vand.u32 %v808, 64
      %v1543 = vand.u32 %v809, 64
      %v1544 = vand.u32 %v810, 64
      %v1545 = vand.u32 %v811, 64
      %v1546 = vand.u32 %v812, 64
      %v1547 = vand.u32 %v813, 64
      %v1548 = vand.u32 %v814, 64
      %vm1549 = vcmp.ne.s32.totalorder %v1541, 0
      %vm1550 = vcmp.ne.s32.totalorder %v1542, 0
      %vm1551 = vcmp.ne.s32.totalorder %v1543, 0
      %vm1552 = vcmp.ne.s32.totalorder %v1544, 0
      %vm1553 = vcmp.ne.s32.totalorder %v1545, 0
      %vm1554 = vcmp.ne.s32.totalorder %v1546, 0
      %vm1555 = vcmp.ne.s32.totalorder %v1547, 0
      %vm1556 = vcmp.ne.s32.totalorder %v1548, 0
      %v1557 = vld [vmem:[#allocation2] sm:$0xff]
      %v1558 = vld [vmem:[#allocation2 + $0x8] sm:$0xff]
      %v1559 = vld [vmem:[#allocation2 + $0x10] sm:$0xff]
      %v1560 = vld [vmem:[#allocation2 + $0x18] sm:$0xff]
      %v1561 = vld [vmem:[#allocation2 + $0x20] sm:$0xff]
      %v1562 = vld [vmem:[#allocation2 + $0x28] sm:$0xff]
      %v1563 = vld [vmem:[#allocation2 + $0x30] sm:$0xff]
      %v1564 = vld [vmem:[#allocation2 + $0x38] sm:$0xff]
      %v1565 = vsel %vm1549, 1, 0
      %v1566 = vsel %vm1550, 1, 0
      %v1567 = vsel %vm1551, 1, 0
      %v1568 = vsel %vm1552, 1, 0
      %v1569 = vsel %vm1553, 1, 0
      %v1570 = vsel %vm1554, 1, 0
      %v1571 = vsel %vm1555, 1, 0
      %v1572 = vsel %vm1556, 1, 0
      %vm1573 = vcmp.eq.s32.totalorder %v1565, 1
      %vm1574 = vcmp.eq.s32.totalorder %v1566, 1
      %vm1575 = vcmp.eq.s32.totalorder %v1567, 1
      %vm1576 = vcmp.eq.s32.totalorder %v1568, 1
      %vm1577 = vcmp.eq.s32.totalorder %v1569, 1
      %vm1578 = vcmp.eq.s32.totalorder %v1570, 1
      %vm1579 = vcmp.eq.s32.totalorder %v1571, 1
      %vm1580 = vcmp.eq.s32.totalorder %v1572, 1
      %1589 = vrot.lane.b32.xlu0 %v1557, 64
      %v1590 = vpop.permute.xlu0 %1589
      %1591 = vrot.lane.b32.xlu0 %v1558, 64
      %v1592 = vpop.permute.xlu0 %1591
      %1593 = vrot.lane.b32.xlu0 %v1559, 64
      %v1594 = vpop.permute.xlu0 %1593
      %1595 = vrot.lane.b32.xlu0 %v1560, 64
      %v1596 = vpop.permute.xlu0 %1595
      %1597 = vrot.lane.b32.xlu0 %v1561, 64
      %v1598 = vpop.permute.xlu0 %1597
      %1599 = vrot.lane.b32.xlu0 %v1562, 64
      %v1600 = vpop.permute.xlu0 %1599
      %1601 = vrot.lane.b32.xlu0 %v1563, 64
      %v1602 = vpop.permute.xlu0 %1601
      %1603 = vrot.lane.b32.xlu0 %v1564, 64
      %v1604 = vpop.permute.xlu0 %1603
      %v1613 = vsel %vm1573, %v1557, %v1590
      %v1614 = vsel %vm1574, %v1558, %v1592
      %v1615 = vsel %vm1575, %v1559, %v1594
      %v1616 = vsel %vm1576, %v1560, %v1596
      %v1617 = vsel %vm1577, %v1561, %v1598
      %v1618 = vsel %vm1578, %v1562, %v1600
      %v1619 = vsel %vm1579, %v1563, %v1602
      %v1620 = vsel %vm1580, %v1564, %v1604
      %1629 = vrot.lane.b32.xlu0 %v1613, 64
      %v1630 = vpop.permute.xlu0 %1629
      %1631 = vrot.lane.b32.xlu0 %v1614, 64
      %v1632 = vpop.permute.xlu0 %1631
      %1633 = vrot.lane.b32.xlu0 %v1615, 64
      %v1634 = vpop.permute.xlu0 %1633
      %1635 = vrot.lane.b32.xlu0 %v1616, 64
      %v1636 = vpop.permute.xlu0 %1635
      %1637 = vrot.lane.b32.xlu0 %v1617, 64
      %v1638 = vpop.permute.xlu0 %1637
      %1639 = vrot.lane.b32.xlu0 %v1618, 64
      %v1640 = vpop.permute.xlu0 %1639
      %1641 = vrot.lane.b32.xlu0 %v1619, 64
      %v1642 = vpop.permute.xlu0 %1641
      %1643 = vrot.lane.b32.xlu0 %v1620, 64
      %v1644 = vpop.permute.xlu0 %1643
      %vm1653 = vcmask 523264
      %1654 = vst.msk [vmem:[#allocation2] sm:$0xff] %vm1653, %v1630
      %1655 = vst.msk [vmem:[#allocation2 + $0x8] sm:$0xff] %vm1653, %v1632
      %1656 = vst.msk [vmem:[#allocation2 + $0x10] sm:$0xff] %vm1653, %v1634
      %1657 = vst.msk [vmem:[#allocation2 + $0x18] sm:$0xff] %vm1653, %v1636
      %1658 = vst.msk [vmem:[#allocation2 + $0x20] sm:$0xff] %vm1653, %v1638
      %1659 = vst.msk [vmem:[#allocation2 + $0x28] sm:$0xff] %vm1653, %v1640
      %1660 = vst.msk [vmem:[#allocation2 + $0x30] sm:$0xff] %vm1653, %v1642
      %1661 = vst.msk [vmem:[#allocation2 + $0x38] sm:$0xff] %vm1653, %v1644
      %v1662 = vld [vmem:[#allocation2] sm:$0xff]
      %v1663 = vld [vmem:[#allocation2 + $0x8] sm:$0xff]
      %v1664 = vld [vmem:[#allocation2 + $0x10] sm:$0xff]
      %v1665 = vld [vmem:[#allocation2 + $0x18] sm:$0xff]
      %v1666 = vld [vmem:[#allocation2 + $0x20] sm:$0xff]
      %v1667 = vld [vmem:[#allocation2 + $0x28] sm:$0xff]
      %v1668 = vld [vmem:[#allocation2 + $0x30] sm:$0xff]
      %v1669 = vld [vmem:[#allocation2 + $0x38] sm:$0xff]
      %v1671 = vsel %vm688, %v654, 0
      %v1674 = vsel %vm688, %v655, 0
      %v1677 = vsel %vm688, %v656, 0
      %v1680 = vsel %vm688, %v657, 0
      %v1683 = vsel %vm688, %v658, 0
      %v1686 = vsel %vm688, %v659, 0
      %v1689 = vsel %vm688, %v660, 0
      %v1692 = vsel %vm688, %v661, 0
      %1694 = vmatprep.subr.bf16.mxu0 0
      %1695 = vmatpush1.bf16.xpose.msra.mxu0 %v1683
      %1696 = vmatprep.subr.bf16.mxu0 0
      %1697 = vmatpush1.bf16.xpose.msra.mxu0 %v1686
      %1698 = vmatprep.subr.bf16.mxu0 0
      %1699 = vmatpush1.bf16.xpose.msra.mxu0 %v1689
      %1700 = vmatprep.subr.bf16.mxu0 0
      %1701 = vmatpush1.bf16.xpose.msra.mxu0 %v1692
      %1702 = vmatprep.subr.bf16.mxu0 0
      %1703 = vmatpush1.bf16.xpose.msra.mxu0 0
      %1704 = vmatprep.subr.bf16.mxu0 0
      %1705 = vmatpush1.bf16.xpose.msra.mxu0 0
      %1706 = vmatprep.subr.bf16.mxu0 0
      %1707 = vmatpush1.bf16.xpose.msra.mxu0 0
      %1708 = vmatprep.subr.bf16.mxu0 0
      %1709 = vmatpush1.bf16.xpose.msra.mxu0 0
      %1710 = vmatprep.subr.bf16.mxu0 0
      %1711 = vmatpush1.bf16.xpose.msra.mxu0 0
      %1712 = vmatprep.subr.bf16.mxu0 0
      %1713 = vmatpush1.bf16.xpose.msra.mxu0 0
      %1714 = vmatprep.subr.bf16.mxu0 0
      %1715 = vmatpush1.bf16.xpose.msra.mxu0 0
      %1716 = vmatprep.subr.bf16.mxu0 0
      %1717 = vmatpush1.bf16.xpose.msra.mxu0 0
      %1718 = vmatprep.subr.bf16.mxu0 0
      %1719 = vmatpush1.bf16.xpose.msra.mxu0 0
      %1720 = vmatprep.subr.bf16.mxu0 0
      %1721 = vmatpush1.bf16.xpose.msra.mxu0 0
      %1722 = vmatprep.subr.bf16.mxu0 0
      %1723 = vmatpush1.bf16.xpose.msra.mxu0 0
      %1724 = vmatprep.subr.bf16.mxu0 0
      %1725 = vmatpush1.bf16.xpose.msra.mxu0 0
      %1726 = vmatprep.mubr.bf16.mxu0 0
      %1727 = vmatmul.mubr.bf16.gmra.mrb[0].mxu0 %v1671
      %v1728 = vpop.f32.mrb[0].mxu0
      %v1729 = vadd.f32 %v1662, %v1728
      %v1730 = vpop.f32.mrb[0].mxu0
      %v1731 = vpop.f32.mrb[0].mxu0
      %v1732 = vadd.f32 %v1663, %v1731
      %v1733 = vpop.f32.mrb[0].mxu0
      %1734 = vmatprep.mubr.bf16.mxu0 0
      %1735 = vmatmul.mubr.bf16.gmra.mrb[0].mxu0 %v1674
      %v1736 = vpop.f32.mrb[0].mxu0
      %v1737 = vadd.f32 %v1664, %v1736
      %v1738 = vpop.f32.mrb[0].mxu0
      %v1739 = vpop.f32.mrb[0].mxu0
      %v1740 = vadd.f32 %v1665, %v1739
      %v1741 = vpop.f32.mrb[0].mxu0
      %1742 = vmatprep.mubr.bf16.mxu0 0
      %1743 = vmatmul.mubr.bf16.gmra.mrb[0].mxu0 %v1677
      %v1744 = vpop.f32.mrb[0].mxu0
      %v1745 = vadd.f32 %v1666, %v1744
      %v1746 = vpop.f32.mrb[0].mxu0
      %v1747 = vpop.f32.mrb[0].mxu0
      %v1748 = vadd.f32 %v1667, %v1747
      %v1749 = vpop.f32.mrb[0].mxu0
      %1750 = vmatprep.mubr.bf16.mxu0 0
      %1751 = vmatmul.mubr.bf16.gmra.mrb[0].mxu0 %v1680
      %v1752 = vpop.f32.mrb[0].mxu0
      %v1753 = vadd.f32 %v1668, %v1752
      %v1754 = vpop.f32.mrb[0].mxu0
      %v1755 = vpop.f32.mrb[0].mxu0
      %v1756 = vadd.f32 %v1669, %v1755
      %v1757 = vpop.f32.mrb[0].mxu0
      %1758 = vdwg.mxu0
      %v1759 = vsel %vm480, 1, 0
      %v1760 = vlaneseq
      %v1761 = vshrl.u32 %v1760, 7
      %v1762 = vsub.s32 0, %v1761
      %v1763 = vrot.slane %v1759, %v1762
      %vm1764 = vcmp.eq.s32.totalorder %v1763, 1
      %v1765 = vsel %vm1764, -1e+30, %v1729
      %v1766 = vsel %vm1764, -1e+30, %v1732
      %v1767 = vsel %vm1764, -1e+30, %v1737
      %v1768 = vsel %vm1764, -1e+30, %v1740
      %v1769 = vsel %vm1764, -1e+30, %v1745
      %v1770 = vsel %vm1764, -1e+30, %v1748
      %v1771 = vsel %vm1764, -1e+30, %v1753
      %v1772 = vsel %vm1764, -1e+30, %v1756
      %v1773 = vsel %vm1653, %v1765, -inf
      %1774 = vmax.xlane.f32.xlu0 %v1773
      %v1775 = vpop.xlane.xlu0 %1774
      %v1776 = vsel %vm1653, %v1766, -inf
      %1777 = vmax.xlane.f32.xlu0 %v1776
      %v1778 = vpop.xlane.xlu0 %1777
      %v1779 = vsel %vm1653, %v1767, -inf
      %1780 = vmax.xlane.f32.xlu0 %v1779
      %v1781 = vpop.xlane.xlu0 %1780
      %v1782 = vsel %vm1653, %v1768, -inf
      %1783 = vmax.xlane.f32.xlu0 %v1782
      %v1784 = vpop.xlane.xlu0 %1783
      %v1785 = vsel %vm1653, %v1769, -inf
      %1786 = vmax.xlane.f32.xlu0 %v1785
      %v1787 = vpop.xlane.xlu0 %1786
      %v1788 = vsel %vm1653, %v1770, -inf
      %1789 = vmax.xlane.f32.xlu0 %v1788
      %v1790 = vpop.xlane.xlu0 %1789
      %v1791 = vsel %vm1653, %v1771, -inf
      %1792 = vmax.xlane.f32.xlu0 %v1791
      %v1793 = vpop.xlane.xlu0 %1792
      %v1794 = vsel %vm1653, %v1772, -inf
      %1795 = vmax.xlane.f32.xlu0 %v1794
      %v1796 = vpop.xlane.xlu0 %1795
      %v1797 = vsub.f32 %v1765, %v1775
      %v1798 = vsub.f32 %v1766, %v1778
      %v1799 = vsub.f32 %v1767, %v1781
      %v1800 = vsub.f32 %v1768, %v1784
      %v1801 = vsub.f32 %v1769, %v1787
      %v1802 = vsub.f32 %v1770, %v1790
      %v1803 = vsub.f32 %v1771, %v1793
      %v1804 = vsub.f32 %v1772, %v1796
      %v1805 = vmul.f32 %v1797, 1.442695
      %v1806 = vpow.pop %v1805
      %v1807 = vmul.f32 %v1798, 1.442695
      %v1808 = vpow.pop %v1807
      %v1809 = vmul.f32 %v1799, 1.442695
      %v1810 = vpow.pop %v1809
      %v1811 = vmul.f32 %v1800, 1.442695
      %v1812 = vpow.pop %v1811
      %v1813 = vmul.f32 %v1801, 1.442695
      %v1814 = vpow.pop %v1813
      %v1815 = vmul.f32 %v1802, 1.442695
      %v1816 = vpow.pop %v1815
      %v1817 = vmul.f32 %v1803, 1.442695
      %v1818 = vpow.pop %v1817
      %v1819 = vmul.f32 %v1804, 1.442695
      %v1820 = vpow.pop %v1819
      %v1821 = vsel %vm1653, %v1806, 0.0
      %1822 = vadd.xlane.f32.xlu0 %v1821
      %v1823 = vpop.xlane.xlu0 %1822
      %v1824 = vsel %vm1653, %v1808, 0.0
      %1825 = vadd.xlane.f32.xlu0 %v1824
      %v1826 = vpop.xlane.xlu0 %1825
      %v1827 = vsel %vm1653, %v1810, 0.0
      %1828 = vadd.xlane.f32.xlu0 %v1827
      %v1829 = vpop.xlane.xlu0 %1828
      %v1830 = vsel %vm1653, %v1812, 0.0
      %1831 = vadd.xlane.f32.xlu0 %v1830
      %v1832 = vpop.xlane.xlu0 %1831
      %v1833 = vsel %vm1653, %v1814, 0.0
      %1834 = vadd.xlane.f32.xlu0 %v1833
      %v1835 = vpop.xlane.xlu0 %1834
      %v1836 = vsel %vm1653, %v1816, 0.0
      %1837 = vadd.xlane.f32.xlu0 %v1836
      %v1838 = vpop.xlane.xlu0 %1837
      %v1839 = vsel %vm1653, %v1818, 0.0
      %1840 = vadd.xlane.f32.xlu0 %v1839
      %v1841 = vpop.xlane.xlu0 %1840
      %v1842 = vsel %vm1653, %v1820, 0.0
      %1843 = vadd.xlane.f32.xlu0 %v1842
      %v1844 = vpop.xlane.xlu0 %1843
      %v1845 = vrcp.pop %v1823
      %v1846 = vrcp.pop %v1826
      %v1847 = vrcp.pop %v1829
      %v1848 = vrcp.pop %v1832
      %v1849 = vrcp.pop %v1835
      %v1850 = vrcp.pop %v1838
      %v1851 = vrcp.pop %v1841
      %v1852 = vrcp.pop %v1844
      %v1853 = vmul.f32 %v1806, %v1845
      %v1854 = vmul.f32 %v1808, %v1846
      %v1855 = vmul.f32 %v1810, %v1847
      %v1856 = vmul.f32 %v1812, %v1848
      %v1857 = vmul.f32 %v1814, %v1849
      %v1858 = vmul.f32 %v1816, %v1850
      %v1859 = vmul.f32 %v1818, %v1851
      %v1860 = vmul.f32 %v1820, %v1852
      %v1861 = vpack.c.bf16 %v1854, %v1853
      %v1862 = vpack.c.bf16 %v1856, %v1855
      %v1863 = vpack.c.bf16 %v1858, %v1857
      %v1864 = vpack.c.bf16 %v1860, %v1859
      %v1865 = vpack.c.bf16 %v613, %v610
      %v1866 = vpack.c.bf16 %v621, %v618
      %v1867 = vpack.c.bf16 %v629, %v626
      %v1868 = vpack.c.bf16 %v637, %v634
      %v1870 = vsel %vm1653, %v1861, 0
      %v1873 = vsel %vm1653, %v1862, 0
      %v1876 = vsel %vm1653, %v1863, 0
      %v1879 = vsel %vm1653, %v1864, 0
      %1881 = vmatprep.subr.bf16.mxu0 0
      %1882 = vmatpush1.bf16.msra.mxu0 %v1865
      %1883 = vmatprep.subr.bf16.mxu0 0
      %1884 = vmatpush1.bf16.msra.mxu0 %v1866
      %1885 = vmatprep.subr.bf16.mxu0 0
      %1886 = vmatpush1.bf16.msra.mxu0 %v1867
      %1887 = vmatprep.subr.bf16.mxu0 0
      %1888 = vmatpush1.bf16.msra.mxu0 %v1868
      %1889 = vmatprep.subr.bf16.mxu0 0
      %1890 = vmatpush1.bf16.msra.mxu0 0
      %1891 = vmatprep.subr.bf16.mxu0 0
      %1892 = vmatpush1.bf16.msra.mxu0 0
      %1893 = vmatprep.subr.bf16.mxu0 0
      %1894 = vmatpush1.bf16.msra.mxu0 0
      %1895 = vmatprep.subr.bf16.mxu0 0
      %1896 = vmatpush1.bf16.msra.mxu0 0
      %1897 = vmatprep.subr.bf16.mxu0 0
      %1898 = vmatpush1.bf16.msra.mxu0 0
      %1899 = vmatprep.subr.bf16.mxu0 0
      %1900 = vmatpush1.bf16.msra.mxu0 0
      %1901 = vmatprep.subr.bf16.mxu0 0
      %1902 = vmatpush1.bf16.msra.mxu0 0
      %1903 = vmatprep.subr.bf16.mxu0 0
      %1904 = vmatpush1.bf16.msra.mxu0 0
      %1905 = vmatprep.subr.bf16.mxu0 0
      %1906 = vmatpush1.bf16.msra.mxu0 0
      %1907 = vmatprep.subr.bf16.mxu0 0
      %1908 = vmatpush1.bf16.msra.mxu0 0
      %1909 = vmatprep.subr.bf16.mxu0 0
      %1910 = vmatpush1.bf16.msra.mxu0 0
      %1911 = vmatprep.subr.bf16.mxu0 0
      %1912 = vmatpush1.bf16.msra.mxu0 0
      %1913 = vmatprep.mubr.bf16.mxu0 0
      %1914 = vmatmul.mubr.bf16.gmra.mrb[0].mxu0 %v1870
      %v1915 = vpop.f32.mrb[0].mxu0
      %v1916 = vadd.f32 0.0, %v1915
      %v1917 = vpop.f32.mrb[0].mxu0
      %v1918 = vpop.f32.mrb[0].mxu0
      %v1919 = vadd.f32 0.0, %v1918
      %v1920 = vpop.f32.mrb[0].mxu0
      %1921 = vmatprep.mubr.bf16.mxu0 0
      %1922 = vmatmul.mubr.bf16.gmra.mrb[0].mxu0 %v1873
      %v1923 = vpop.f32.mrb[0].mxu0
      %v1924 = vadd.f32 0.0, %v1923
      %v1925 = vpop.f32.mrb[0].mxu0
      %v1926 = vpop.f32.mrb[0].mxu0
      %v1927 = vadd.f32 0.0, %v1926
      %v1928 = vpop.f32.mrb[0].mxu0
      %1929 = vmatprep.mubr.bf16.mxu0 0
      %1930 = vmatmul.mubr.bf16.gmra.mrb[0].mxu0 %v1876
      %v1931 = vpop.f32.mrb[0].mxu0
      %v1932 = vadd.f32 0.0, %v1931
      %v1933 = vpop.f32.mrb[0].mxu0
      %v1934 = vpop.f32.mrb[0].mxu0
      %v1935 = vadd.f32 0.0, %v1934
      %v1936 = vpop.f32.mrb[0].mxu0
      %1937 = vmatprep.mubr.bf16.mxu0 0
      %1938 = vmatmul.mubr.bf16.gmra.mrb[0].mxu0 %v1879
      %v1939 = vpop.f32.mrb[0].mxu0
      %v1940 = vadd.f32 0.0, %v1939
      %v1941 = vpop.f32.mrb[0].mxu0
      %v1942 = vpop.f32.mrb[0].mxu0
      %v1943 = vadd.f32 0.0, %v1942
      %v1944 = vpop.f32.mrb[0].mxu0
      %1945 = vdwg.mxu0
      %1946 = vst.msk [vmem:[%s443] sm:$0xff] %vm688, %v1916
      %1947 = vst.msk [vmem:[%s443 + $0x8] sm:$0xff] %vm688, %v1919
      %1948 = vst.msk [vmem:[%s443 + $0x10] sm:$0xff] %vm688, %v1924
      %1949 = vst.msk [vmem:[%s443 + $0x18] sm:$0xff] %vm688, %v1927
      %1950 = vst.msk [vmem:[%s443 + $0x20] sm:$0xff] %vm688, %v1932
      %1951 = vst.msk [vmem:[%s443 + $0x28] sm:$0xff] %vm688, %v1935
      %1952 = vst.msk [vmem:[%s443 + $0x30] sm:$0xff] %vm688, %v1940
      %1953 = vst.msk [vmem:[%s443 + $0x38] sm:$0xff] %vm688, %v1943
      %p1954 = scmp.lt.s32.totalorder %s23, 1
      %s1955 = scalar_select %p1954, %s23, 1
      %p1956 = scmp.lt.s32.totalorder %s24, 3
      %s1957 = scalar_select %p1956, %s24, 3
      %s1958 = smul.addr %s1957, 8
      %s1959 = smul.addr %s1955, 32
      %s1960 = sadd.s32 %s1958, %s1959
      %s1961 = smul.addr %s1960, 8
      %s1962 = scalar_lea.vmem %s8, %s1961
      // Predicated region
      $region53: #{tpu_custom_call.1} parent=51 // pred_check
        %p1963 = pneg %p256
      $region54: #{tpu_custom_call.1} parent=51 // pred_check_branch
        %1965 = sbr.rel (%p1963) target = $region56
      $region55: #{tpu_custom_call.1} parent=51 // pred_region
        _
      $region56: #{tpu_custom_call.1} parent=51 // pred_fallthru
        _
    $region52: #{tpu_custom_call.1} parent=5 // pred_fallthru
      _
    %p1966 = scmp.le.s32.totalorder 2, %s14
    // Predicated region
    $region57: #{tpu_custom_call.1} parent=5 // pred_check
      %p1967 = pneg %p1966
    $region58: #{tpu_custom_call.1} parent=5 // pred_check_branch
      %1969 = sbr.rel (%p1967) target = $region60
    $region59: #{tpu_custom_call.1} parent=5 // pred_region
      %s1970 = ssub.s32 %s14, 2
      // Predicated region
      $region61: #{tpu_custom_call.1} parent=59 // pred_check
        %p1971 = pneg %p262
      $region62: #{tpu_custom_call.1} parent=59 // pred_check_branch
        %1973 = sbr.rel (%p1971) target = $region64
      $region63: #{tpu_custom_call.1} parent=59 // pred_region
        %p1974 = scmp.lt.s32.totalorder %s25, 1
        %s1975 = scalar_select %p1974, %s25, 1
        %p1976 = scmp.lt.s32.totalorder %s26, 3
        %s1977 = scalar_select %p1976, %s26, 3
        %s1978 = smul.addr %s1977, 8
        %s1979 = smul.addr %s1975, 32
        %s1980 = sadd.s32 %s1978, %s1979
        %s1981 = smul.addr %s1980, 8
        %s1982 = scalar_lea.vmem %s8, %s1981
      $region64: #{tpu_custom_call.1} parent=59 // pred_fallthru
        _
    $region60: #{tpu_custom_call.1} parent=5 // pred_fallthru
      _
  $region6: #{tpu_custom_call.1} parent=0 // loop_footer
    %s18 = sadd.s32 1, %s14
  $region7: #{tpu_custom_call.1} parent=0 // loop_footer_branch
    %13 = sbr.rel target = $region3
  $region8: #{tpu_custom_call.1} parent=0 // loop_exit
    _

</llo_original>
